<compile_context>
chip_gen: v5e
topology: v5e:2x2
jax: 0.10.0
libtpu: 0.0.40
codegen_flags: <defaults>
</compile_context>

<pallas_src>
import math

import jax
import jax.numpy as jnp
import numpy as np
from jax import lax
from jax.experimental import pallas as pl
from jax.experimental.pallas import tpu as pltpu


def _pair(v):
    if isinstance(v, (tuple, list)):
        return tuple(v)
    return (v, v)


def _ceil_to(a, m):
    return ((a + m - 1) // m) * m


def _same_padding(in_shape, kernel_size, stride, dilation):
    """Replicates the padding arithmetic in SamePaddingConv2d.__init__."""
    ih, iw = in_shape
    kh, kw = kernel_size
    sh, sw = stride
    dh, dw = dilation
    oh = int(math.ceil(float(ih) / float(sh)))
    ow = int(math.ceil(float(iw) / float(sw)))
    pad_h = max((oh - 1) * sh + kh + (kh - 1) * (dh - 1) - ih, 0)
    pad_w = max((ow - 1) * sw + kw + (kw - 1) * (dw - 1) - iw, 0)
    pad_top = pad_h // 2
    pad_bottom = pad_h - pad_top
    pad_left = pad_w // 2
    pad_right = pad_w - pad_left
    return (oh, ow), (pad_top, pad_bottom, pad_left, pad_right)


def _largest_divisor_at_most(n, cap):
    cap = max(1, min(n, cap))
    for d in range(cap, 0, -1):
        if n % d == 0:
            return d
    return 1


def _choose_strip_rows(OH, OW, target):
    """Divisor OHs of OH so the per-strip M = OHs*OW is near `target` and sublane-aligned."""
    if OH * OW <= 2 * target:
        return OH
    want = max(1, target // max(OW, 1))
    best = OH
    for d in range(1, OH + 1):
        if OH % d:
            continue
        if d != OH and (d * OW) % 8 != 0:      # keep the output block's sublane dim aligned
            continue
        best = d
        if d >= want:
            break
    return best


def _build_conv_kernel(KH, KW, sh, sw, dh, dw, OHs, OW, Cin_p, bN, tn, n_mh, precision):
    """One grid step = bN images x one OH strip x one Cout tile.  Single fused-K MXU matmul."""
    Ms = bN * OHs * OW               # matmul M for this step

    def kernel(x_ref, w_ref, b_ref, o_ref, patch_ref):
        # x_ref:     (sh, sw, bN, Hq, Wq, Cin_p)  phase-decomposed padded input (bN images)
        # w_ref:     (KH*KW*Cin_p, tn)            fused-K weight slab for this Cout tile
        # b_ref:     (1, tn)                      f32 bias (zero in padded columns)
        # o_ref:     (bN, OHs*OW, tn)             lane-dense output block (one OH strip)
        # patch_ref: (Ms, KH*KW*Cin_p)            VMEM scratch: implicit-im2col patch matrix
        row0 = 0 if n_mh == 1 else pl.program_id(1) * OHs     # first output row of the strip

        # Build the patch matrix ONCE (contiguous slices; stride absorbed by phase decomp).
        for kh in range(KH):
            qh, rh = divmod(kh * dh, sh)   # input row oh*sh + kh*dh == phase rh, row oh+qh
            for kw in range(KW):
                qw, rw = divmod(kw * dw, sw)
                xs = x_ref[rh, rw, :, pl.ds(row0 + qh, OHs), pl.ds(qw, OW), :]
                t = kh * KW + kw
                patch_ref[:, t * Cin_p:(t + 1) * Cin_p] = xs.reshape(Ms, Cin_p)

        # Single MXU matmul, K = KH*KW*Cin_p, accumulation stays inside the MXU.
        acc = jnp.dot(patch_ref[...], w_ref[...],
                      preferred_element_type=jnp.float32, precision=precision)
        acc = acc + b_ref[...]                                  # epilogue bias (VPU slot)
        o_ref[...] = acc.reshape(bN, OHs * OW, tn).astype(o_ref.dtype)

    return kernel


def same_padding_conv2d(x, weight, bias=None, *, stride, dilation=1,
                        compute_dtype=jnp.bfloat16, precision=None, m_target=512):
    """Forward pass of SamePaddingConv2d.

    x: (N, Cin, H, W) NCHW; weight: (Cout, Cin, KH, KW) OIHW; bias: (Cout,) or None.
    Returns (N, Cout, OH, OW).  compute_dtype is the matmul stream dtype (f32 accumulation);
    pass jnp.float32 + precision=lax.Precision.HIGHEST for strict f32 parity (≈3x MXU cost).
    """
    N, Cin, H, W = x.shape
    Cout, Cin_w, KH, KW = weight.shape
    assert Cin == Cin_w, "channel mismatch"
    sh, sw = _pair(stride)
    dh, dw = _pair(dilation)
    out_dtype = x.dtype
    compute_dtype = jnp.dtype(compute_dtype)

    (OH, OW), (pt, pb, p_left, p_right) = _same_padding((H, W), (KH, KW), (sh, sw), (dh, dw))
    Mimg = OH * OW

    # ---- layout-friendly sizes -----------------------------------------------------------
    sub = max(8, 32 // compute_dtype.itemsize)       # sublane multiple: 8 f32, 16 bf16
    Cin_p = _ceil_to(Cin, sub)
    Ktot = KH * KW * Cin_p

    # Cout tile width: 256 when Cout amortizes the padding (v6e/v7x 2x256^2 MXU), else 128
    # (always fine on v5e's 4x128^2).  Either way stores are full-lane (lane-dense).
    if Cout > 192:
        Cout_p, tn = _ceil_to(Cout, 256), 256
    else:
        Cout_p, tn = _ceil_to(Cout, 128), 128
    n_j = Cout_p // tn

    # M tiling: strip OH for big images, batch images for small ones, targeting M ~ m_target.
    OHs = _choose_strip_rows(OH, OW, m_target)
    n_mh = OH // OHs
    bN = _largest_divisor_at_most(N, max(1, m_target // max(Mimg, 1))) if n_mh == 1 else 1
    Ms = bN * OHs * OW

    # ---- glue: one reorg pass over the (small) input, not a KH*KW patch blow-up -----------
    H2 = _ceil_to(H + pt + pb, sh)
    W2 = _ceil_to(W + p_left + p_right, sw)
    Hq, Wq = H2 // sh, W2 // sw
    xc = x.astype(compute_dtype)
    x_pad = jnp.pad(xc, ((0, 0), (0, Cin_p - Cin),
                         (pt, H2 - H - pt), (p_left, W2 - W - p_left)))
    # (N,Cin_p,H2,W2) -> (N,Cin_p,Hq,sh,Wq,sw) -> (sh,sw,N,Hq,Wq,Cin_p): space-to-batch.
    # x_ph[rh, rw, n, i, j, c] == x_pad[n, c, i*sh + rh, j*sw + rw]
    x_ph = jnp.transpose(x_pad.reshape(N, Cin_p, Hq, sh, Wq, sw), (3, 5, 0, 2, 4, 1))
    # TODO(synk): for NHWC end-to-end pipelines, keep the channels-last/phase layout between
    # consecutive SAME convs instead of round-tripping through NCHW every layer.

    # weight OIHW -> (KH,KW,Cin,Cout) -> pad -> (KH*KW*Cin_p, Cout_p); tap-major, cin-minor,
    # matching the in-kernel patch assembly order.
    w_r = jnp.transpose(weight, (2, 3, 1, 0)).reshape(KH * KW, Cin, Cout)
    w_r = jnp.pad(w_r, ((0, 0), (0, Cin_p - Cin), (0, Cout_p - Cout)))
    w_r = w_r.reshape(Ktot, Cout_p).astype(compute_dtype)

    if bias is None:
        b_r = jnp.zeros((1, Cout_p), jnp.float32)
    else:
        b_r = jnp.pad(bias.astype(jnp.float32).reshape(1, Cout), ((0, 0), (0, Cout_p - Cout)))

    # ---- pallas_call -----------------------------------------------------------------------
    kernel = _build_conv_kernel(KH, KW, sh, sw, dh, dw, OHs, OW, Cin_p, bN, tn, n_mh, precision)

    out_isz = jnp.dtype(out_dtype).itemsize
    cdt_isz = compute_dtype.itemsize
    x_blk = sh * sw * bN * Hq * Wq * Cin_p * cdt_isz
    w_blk = Ktot * tn * cdt_isz
    o_blk = bN * OHs * OW * tn * out_isz
    scratch_bytes = Ms * (Ktot * cdt_isz + tn * 4)          # patch matrix + f32 result
    vmem_limit = int(min(max(2 * (x_blk + w_blk + o_blk) + scratch_bytes + (8 << 20),
                             32 << 20), 48 << 20))
    cost = pl.CostEstimate(
        flops=2 * N * Mimg * Ktot * Cout_p,
        transcendentals=0,
        bytes_accessed=int(sh * sw * N * Hq * Wq * Cin_p * cdt_isz
                           + Ktot * Cout_p * cdt_isz
                           + N * Mimg * Cout_p * out_isz))

    out = pl.pallas_call(
        kernel,
        out_shape=jax.ShapeDtypeStruct((N, Mimg, Cout_p), out_dtype),
        grid=(N // bN, n_mh, n_j),
        in_specs=[
            pl.BlockSpec((sh, sw, bN, Hq, Wq, Cin_p), lambda n, mi, j: (0, 0, n, 0, 0, 0)),
            pl.BlockSpec((Ktot, tn), lambda n, mi, j: (0, j)),
            pl.BlockSpec((1, tn), lambda n, mi, j: (0, j)),
        ],
        out_specs=pl.BlockSpec((bN, OHs * OW, tn), lambda n, mi, j: (n, mi, j)),
        scratch_shapes=[pltpu.VMEM((Ms, Ktot), compute_dtype)],
        compiler_params=pltpu.CompilerParams(
            dimension_semantics=("parallel", "parallel", "parallel"),
            vmem_limit_bytes=vmem_limit),
        cost_estimate=cost,
    )(x_ph, w_r, b_r)
    # TODO(synk): for late stages where the weight slab >> per-image activations, flip the grid
    # to (n_j, N//bN, n_mh) so weights are not re-streamed once per image block.

    out = out.reshape(N, OH, OW, Cout_p)
    if Cout_p != Cout:
        out = out[..., :Cout]
    return jnp.transpose(out, (0, 3, 1, 2))      # back to NCHW


if __name__ == "__main__":
    # Module config (small): in_spatial_shape=16, in_channels=4, out_channels=8,
    # kernel_size=3, stride=2, dilation=1  (Conv2d default bias=True).
    N, Cin, H, W = 2, 4, 16, 16
    Cout, KH, KW = 8, 3, 3
    stride = (2, 2)
    dilation = (1, 1)

    key = jax.random.PRNGKey(0)
    kx, kw_, kb = jax.random.split(key, 3)
    x = jax.random.normal(kx, (N, Cin, H, W), dtype=jnp.float32)

    # Deterministic param init (PyTorch Conv2d-style uniform bound 1/sqrt(fan_in)).
    fan_in = Cin * KH * KW
    bound = 1.0 / math.sqrt(fan_in)
    weight = jax.random.uniform(kw_, (Cout, Cin, KH, KW), minval=-bound, maxval=bound,
                                dtype=jnp.float32)
    bias = jax.random.uniform(kb, (Cout,), minval=-bound, maxval=bound, dtype=jnp.float32)

    # Reference: explicit SAME zero-pad + VALID conv (matches nn.ZeroPad2d + nn.Conv2d).
    (OH, OW), (pt, pb, p_left, p_right) = _same_padding((H, W), (KH, KW), stride, dilation)
    x_pad_nchw = jnp.pad(x, ((0, 0), (0, 0), (pt, pb), (p_left, p_right)))
    ref = lax.conv_general_dilated(
        x_pad_nchw, weight, window_strides=stride, padding="VALID",
        rhs_dilation=dilation, dimension_numbers=("NCHW", "OIHW", "NCHW"),
    ) + bias[None, :, None, None]

    # Default path: bf16 activation/weight streams, f32 accumulation (looser check).
    out = same_padding_conv2d(x, weight, bias, stride=stride, dilation=dilation)
    out = jax.block_until_ready(out)
    assert out.shape == (N, Cout, OH, OW), (out.shape, (N, Cout, OH, OW))
    np.testing.assert_allclose(np.asarray(out), np.asarray(ref), atol=3e-2, rtol=3e-2)

    # f32 stream path (default MXU precision: bf16 passes with f32 accumulation) — tighter.
    out_f32 = same_padding_conv2d(x, weight, bias, stride=stride, dilation=dilation,
                                  compute_dtype=jnp.float32)
    out_f32 = jax.block_until_ready(out_f32)
    np.testing.assert_allclose(np.asarray(out_f32), np.asarray(ref), atol=2e-3, rtol=2e-3)

    print("KERNEL_OK")
</pallas_src>

<mosaic_0001>
module attributes {stable_mosaic.version = 11 : i64} {
  func.func @kernel(%arg0: i32, %arg1: i32, %arg2: i32, %arg3: memref<2x2x2x9x9x16xbf16, #tpu.memory_space<vmem>>, %arg4: memref<144x128xbf16, #tpu.memory_space<vmem>>, %arg5: memref<1x128xf32, #tpu.memory_space<vmem>>, %arg6: memref<2x64x128xf32, #tpu.memory_space<vmem>>, %arg7: memref<128x144xbf16, #tpu.memory_space<vmem>>) attributes {dimension_semantics = [#tpu.dimension_semantics<parallel>, #tpu.dimension_semantics<parallel>, #tpu.dimension_semantics<parallel>], iteration_bounds = array<i64: 1, 1, 1>, scalar_prefetch = 0 : i64, scratch_operands = 1 : i64, tpu.core_type = #tpu.core_type<tc>, window_params = [{transform_indices = @transform_0, window_bounds = array<i64: 2, 2, 2, 9, 9, 16>}, {transform_indices = @transform_1, window_bounds = array<i64: 144, 128>}, {transform_indices = @transform_2, window_bounds = array<i64: 1, 128>}, {transform_indices = @transform_3, window_bounds = array<i64: 2, 64, 128>}]} {
    %c0 = arith.constant 0 : index
    %c0_0 = arith.constant 0 : index
    %c0_1 = arith.constant 0 : index
    %c0_2 = arith.constant 0 : index
    %c0_3 = arith.constant 0 : index
    %c0_4 = arith.constant 0 : index
    %0 = vector.load %arg3[%c0, %c0_0, %c0_1, %c0_2, %c0_3, %c0_4] : memref<2x2x2x9x9x16xbf16, #tpu.memory_space<vmem>>, vector<1x1x2x8x8x16xbf16>
    %1 = vector.shape_cast %0 : vector<1x1x2x8x8x16xbf16> to vector<2x8x8x16xbf16>
    %2 = vector.shape_cast %1 : vector<2x8x8x16xbf16> to vector<128x16xbf16>
    %c0_5 = arith.constant 0 : index
    %c0_6 = arith.constant 0 : index
    %3 = vector.load %arg7[%c0_5, %c0_6] : memref<128x144xbf16, #tpu.memory_space<vmem>>, vector<128x16xbf16>
    tpu.vector_store %arg7[%c0_5, %c0_6], %2 {strides = array<i32>} : memref<128x144xbf16, #tpu.memory_space<vmem>>, vector<128x16xbf16>,
    %c0_7 = arith.constant 0 : index
    %c1 = arith.constant 1 : index
    %c0_8 = arith.constant 0 : index
    %c0_9 = arith.constant 0 : index
    %c0_10 = arith.constant 0 : index
    %c0_11 = arith.constant 0 : index
    %4 = vector.load %arg3[%c0_7, %c1, %c0_8, %c0_9, %c0_10, %c0_11] : memref<2x2x2x9x9x16xbf16, #tpu.memory_space<vmem>>, vector<1x1x2x8x8x16xbf16>
    %5 = vector.shape_cast %4 : vector<1x1x2x8x8x16xbf16> to vector<2x8x8x16xbf16>
    %6 = vector.shape_cast %5 : vector<2x8x8x16xbf16> to vector<128x16xbf16>
    %c0_12 = arith.constant 0 : index
    %c16 = arith.constant 16 : index
    %7 = vector.load %arg7[%c0_12, %c16] : memref<128x144xbf16, #tpu.memory_space<vmem>>, vector<128x16xbf16>
    tpu.vector_store %arg7[%c0_12, %c16], %6 {strides = array<i32>} : memref<128x144xbf16, #tpu.memory_space<vmem>>, vector<128x16xbf16>,
    %c0_13 = arith.constant 0 : index
    %c0_14 = arith.constant 0 : index
    %c0_15 = arith.constant 0 : index
    %c0_16 = arith.constant 0 : index
    %c1_17 = arith.constant 1 : index
    %c0_18 = arith.constant 0 : index
    %8 = vector.load %arg3[%c0_13, %c0_14, %c0_15, %c0_16, %c1_17, %c0_18] : memref<2x2x2x9x9x16xbf16, #tpu.memory_space<vmem>>, vector<1x1x2x8x8x16xbf16>
    %9 = vector.shape_cast %8 : vector<1x1x2x8x8x16xbf16> to vector<2x8x8x16xbf16>
    %10 = vector.shape_cast %9 : vector<2x8x8x16xbf16> to vector<128x16xbf16>
    %c0_19 = arith.constant 0 : index
    %c32 = arith.constant 32 : index
    %11 = vector.load %arg7[%c0_19, %c32] : memref<128x144xbf16, #tpu.memory_space<vmem>>, vector<128x16xbf16>
    tpu.vector_store %arg7[%c0_19, %c32], %10 {strides = array<i32>} : memref<128x144xbf16, #tpu.memory_space<vmem>>, vector<128x16xbf16>,
    %c1_20 = arith.constant 1 : index
    %c0_21 = arith.constant 0 : index
    %c0_22 = arith.constant 0 : index
    %c0_23 = arith.constant 0 : index
    %c0_24 = arith.constant 0 : index
    %c0_25 = arith.constant 0 : index
    %12 = vector.load %arg3[%c1_20, %c0_21, %c0_22, %c0_23, %c0_24, %c0_25] : memref<2x2x2x9x9x16xbf16, #tpu.memory_space<vmem>>, vector<1x1x2x8x8x16xbf16>
    %13 = vector.shape_cast %12 : vector<1x1x2x8x8x16xbf16> to vector<2x8x8x16xbf16>
    %14 = vector.shape_cast %13 : vector<2x8x8x16xbf16> to vector<128x16xbf16>
    %c0_26 = arith.constant 0 : index
    %c48 = arith.constant 48 : index
    %15 = vector.load %arg7[%c0_26, %c48] : memref<128x144xbf16, #tpu.memory_space<vmem>>, vector<128x16xbf16>
    tpu.vector_store %arg7[%c0_26, %c48], %14 {strides = array<i32>} : memref<128x144xbf16, #tpu.memory_space<vmem>>, vector<128x16xbf16>,
    %c1_27 = arith.constant 1 : index
    %c1_28 = arith.constant 1 : index
    %c0_29 = arith.constant 0 : index
    %c0_30 = arith.constant 0 : index
    %c0_31 = arith.constant 0 : index
    %c0_32 = arith.constant 0 : index
    %16 = vector.load %arg3[%c1_27, %c1_28, %c0_29, %c0_30, %c0_31, %c0_32] : memref<2x2x2x9x9x16xbf16, #tpu.memory_space<vmem>>, vector<1x1x2x8x8x16xbf16>
    %17 = vector.shape_cast %16 : vector<1x1x2x8x8x16xbf16> to vector<2x8x8x16xbf16>
    %18 = vector.shape_cast %17 : vector<2x8x8x16xbf16> to vector<128x16xbf16>
    %c0_33 = arith.constant 0 : index
    %c64 = arith.constant 64 : index
    %19 = vector.load %arg7[%c0_33, %c64] : memref<128x144xbf16, #tpu.memory_space<vmem>>, vector<128x16xbf16>
    tpu.vector_store %arg7[%c0_33, %c64], %18 {strides = array<i32>} : memref<128x144xbf16, #tpu.memory_space<vmem>>, vector<128x16xbf16>,
    %c1_34 = arith.constant 1 : index
    %c0_35 = arith.constant 0 : index
    %c0_36 = arith.constant 0 : index
    %c0_37 = arith.constant 0 : index
    %c1_38 = arith.constant 1 : index
    %c0_39 = arith.constant 0 : index
    %20 = vector.load %arg3[%c1_34, %c0_35, %c0_36, %c0_37, %c1_38, %c0_39] : memref<2x2x2x9x9x16xbf16, #tpu.memory_space<vmem>>, vector<1x1x2x8x8x16xbf16>
    %21 = vector.shape_cast %20 : vector<1x1x2x8x8x16xbf16> to vector<2x8x8x16xbf16>
    %22 = vector.shape_cast %21 : vector<2x8x8x16xbf16> to vector<128x16xbf16>
    %c0_40 = arith.constant 0 : index
    %c80 = arith.constant 80 : index
    %23 = vector.load %arg7[%c0_40, %c80] : memref<128x144xbf16, #tpu.memory_space<vmem>>, vector<128x16xbf16>
    tpu.vector_store %arg7[%c0_40, %c80], %22 {strides = array<i32>} : memref<128x144xbf16, #tpu.memory_space<vmem>>, vector<128x16xbf16>,
    %c0_41 = arith.constant 0 : index
    %c0_42 = arith.constant 0 : index
    %c0_43 = arith.constant 0 : index
    %c1_44 = arith.constant 1 : index
    %c0_45 = arith.constant 0 : index
    %c0_46 = arith.constant 0 : index
    %24 = vector.load %arg3[%c0_41, %c0_42, %c0_43, %c1_44, %c0_45, %c0_46] : memref<2x2x2x9x9x16xbf16, #tpu.memory_space<vmem>>, vector<1x1x2x8x8x16xbf16>
    %25 = vector.shape_cast %24 : vector<1x1x2x8x8x16xbf16> to vector<2x8x8x16xbf16>
    %26 = vector.shape_cast %25 : vector<2x8x8x16xbf16> to vector<128x16xbf16>
    %c0_47 = arith.constant 0 : index
    %c96 = arith.constant 96 : index
    %27 = vector.load %arg7[%c0_47, %c96] : memref<128x144xbf16, #tpu.memory_space<vmem>>, vector<128x16xbf16>
    tpu.vector_store %arg7[%c0_47, %c96], %26 {strides = array<i32>} : memref<128x144xbf16, #tpu.memory_space<vmem>>, vector<128x16xbf16>,
    %c0_48 = arith.constant 0 : index
    %c1_49 = arith.constant 1 : index
    %c0_50 = arith.constant 0 : index
    %c1_51 = arith.constant 1 : index
    %c0_52 = arith.constant 0 : index
    %c0_53 = arith.constant 0 : index
    %28 = vector.load %arg3[%c0_48, %c1_49, %c0_50, %c1_51, %c0_52, %c0_53] : memref<2x2x2x9x9x16xbf16, #tpu.memory_space<vmem>>, vector<1x1x2x8x8x16xbf16>
    %29 = vector.shape_cast %28 : vector<1x1x2x8x8x16xbf16> to vector<2x8x8x16xbf16>
    %30 = vector.shape_cast %29 : vector<2x8x8x16xbf16> to vector<128x16xbf16>
    %c0_54 = arith.constant 0 : index
    %c112 = arith.constant 112 : index
    %31 = vector.load %arg7[%c0_54, %c112] : memref<128x144xbf16, #tpu.memory_space<vmem>>, vector<128x16xbf16>
    tpu.vector_store %arg7[%c0_54, %c112], %30 {strides = array<i32>} : memref<128x144xbf16, #tpu.memory_space<vmem>>, vector<128x16xbf16>,
    %c0_55 = arith.constant 0 : index
    %c0_56 = arith.constant 0 : index
    %c0_57 = arith.constant 0 : index
    %c1_58 = arith.constant 1 : index
    %c1_59 = arith.constant 1 : index
    %c0_60 = arith.constant 0 : index
    %32 = vector.load %arg3[%c0_55, %c0_56, %c0_57, %c1_58, %c1_59, %c0_60] : memref<2x2x2x9x9x16xbf16, #tpu.memory_space<vmem>>, vector<1x1x2x8x8x16xbf16>
    %33 = vector.shape_cast %32 : vector<1x1x2x8x8x16xbf16> to vector<2x8x8x16xbf16>
    %34 = vector.shape_cast %33 : vector<2x8x8x16xbf16> to vector<128x16xbf16>
    %c0_61 = arith.constant 0 : index
    %c128 = arith.constant 128 : index
    %35 = vector.load %arg7[%c0_61, %c128] : memref<128x144xbf16, #tpu.memory_space<vmem>>, vector<128x16xbf16>
    tpu.vector_store %arg7[%c0_61, %c128], %34 {strides = array<i32>} : memref<128x144xbf16, #tpu.memory_space<vmem>>, vector<128x16xbf16>,
    %c0_62 = arith.constant 0 : index
    %c0_63 = arith.constant 0 : index
    %36 = vector.load %arg7[%c0_62, %c0_63] : memref<128x144xbf16, #tpu.memory_space<vmem>>, vector<128x144xbf16>
    %c0_64 = arith.constant 0 : index
    %c0_65 = arith.constant 0 : index
    %37 = vector.load %arg4[%c0_64, %c0_65] : memref<144x128xbf16, #tpu.memory_space<vmem>>, vector<144x128xbf16>
    %cst = arith.constant dense<0.000000e+00> : vector<128x128xf32>
    %38 = tpu.matmul %36, %37, %cst {dimension_numbers = #tpu.dot_dimension_numbers<[1], [0], [0], [1], [0, 0, 1, 1], [], []>} : vector<128x144xbf16>, vector<144x128xbf16>, vector<128x128xf32> -> vector<128x128xf32>
    %c0_66 = arith.constant 0 : index
    %c0_67 = arith.constant 0 : index
    %39 = vector.load %arg5[%c0_66, %c0_67] : memref<1x128xf32, #tpu.memory_space<vmem>>, vector<1x128xf32>
    %40 = vector.broadcast %39 : vector<1x128xf32> to vector<128x128xf32>
    %41 = arith.addf %38, %40 : vector<128x128xf32>
    %42 = vector.shape_cast %41 : vector<128x128xf32> to vector<2x64x128xf32>
    %c0_68 = arith.constant 0 : index
    %c0_69 = arith.constant 0 : index
    %c0_70 = arith.constant 0 : index
    %43 = vector.load %arg6[%c0_68, %c0_69, %c0_70] : memref<2x64x128xf32, #tpu.memory_space<vmem>>, vector<2x64x128xf32>
    tpu.vector_store %arg6[%c0_68, %c0_69, %c0_70], %42 {strides = array<i32>} : memref<2x64x128xf32, #tpu.memory_space<vmem>>, vector<2x64x128xf32>,
    return
  }
  func.func @transform_0(%arg0: i32, %arg1: i32, %arg2: i32) -> (i32, i32, i32, i32, i32, i32) {
    %c0_i32 = arith.constant 0 : i32
    %c0_i32_0 = arith.constant 0 : i32
    %c0_i32_1 = arith.constant 0 : i32
    %c0_i32_2 = arith.constant 0 : i32
    %c0_i32_3 = arith.constant 0 : i32
    %c0_i32_4 = arith.constant 0 : i32
    return %c0_i32, %c0_i32_0, %arg0, %c0_i32_1, %c0_i32_2, %c0_i32_3 : i32, i32, i32, i32, i32, i32
  }
  func.func @transform_1(%arg0: i32, %arg1: i32, %arg2: i32) -> (i32, i32) {
    %c0_i32 = arith.constant 0 : i32
    %c0_i32_0 = arith.constant 0 : i32
    return %c0_i32, %arg2 : i32, i32
  }
  func.func @transform_2(%arg0: i32, %arg1: i32, %arg2: i32) -> (i32, i32) {
    %c0_i32 = arith.constant 0 : i32
    %c0_i32_0 = arith.constant 0 : i32
    return %c0_i32, %arg2 : i32, i32
  }
  func.func @transform_3(%arg0: i32, %arg1: i32, %arg2: i32) -> (i32, i32, i32) {
    %c0_i32 = arith.constant 0 : i32
    return %arg0, %arg1, %arg2 : i32, i32, i32
  }
}

</mosaic_0001>

<llo_original>
// kernel: tpu_custom_call.1
$region0: #{tpu_custom_call.1}
  #allocation0 [shape = 'u32[]', space=smem, size = 0x4, offset = 0x4, fixed_abs, tag = 'smem constant byte address 0x4 - core index']
  #allocation1 [shape = 'u32[72,128]{1,0:T(1,128)}', space=vmem, size = 0x9000, scoped, tag = 'internal scratch']
  #allocation2 [shape = 'bf16[128,144]{1,0:T(8,128)(2,1)}', space=vmem, size = 0x10000, scoped, tag = 'scratch operand']
  %s0 = inlined_call_operand.vmem [shape: bf16[2,2,2,9,9,16], index: 0, kind: input, shape index: {}]
  %s1 = inlined_call_operand.vmem [shape: bf16[144,128], index: 1, kind: input, shape index: {}]
  %s2 = inlined_call_operand.vmem [shape: f32[1,128], index: 2, kind: input, shape index: {}]
  %s3 = inlined_call_operand.hbm [shape: f32[2,64,128], index: 3, kind: output, shape index: {}]
  %s4 = sld [smem:[#allocation0]]
  $region22: #{tpu_custom_call.1} parent=0
    _
  %s6 = ssub.s32 1, %s4
  %s7 = scalar_select 0, %s6, %s4
  $region1: #{tpu_custom_call.1} parent=0
    #allocation3 [shape = 'u8[65536]{0}', space=vmem, size = 0x10000, scoped, tag = 'output window, operand 0, single buffered']
    #allocation4 [shape = 's32[1]{0}', space=sflag, size = 0x4, scoped, tag = 'scoped memory for tpu_custom_call.1']
    %8 = vsyncpa [#allocation4], 0
    // Predicated region
    $region2: #{tpu_custom_call.1} parent=1 // pred_check
      _
    $region3: #{tpu_custom_call.1} parent=1 // pred_check_branch
      %10 = sbr.rel (0) target = $region5
    $region4: #{tpu_custom_call.1} parent=1 // pred_region
      _
    $region5: #{tpu_custom_call.1} parent=1 // pred_fallthru
      _
    // Predicated region
    $region6: #{tpu_custom_call.1} parent=1 // pred_check
      _
    $region7: #{tpu_custom_call.1} parent=1 // pred_check_branch
      %12 = sbr.rel (0) target = $region9
    $region8: #{tpu_custom_call.1} parent=1 // pred_region
      _
    $region9: #{tpu_custom_call.1} parent=1 // pred_fallthru
      _
    // Predicated region
    $region10: #{tpu_custom_call.1} parent=1 // pred_check
      _
    $region11: #{tpu_custom_call.1} parent=1 // pred_check_branch
      %14 = sbr.rel (0) target = $region13
    $region12: #{tpu_custom_call.1} parent=1 // pred_region
      _
    $region13: #{tpu_custom_call.1} parent=1 // pred_fallthru
      _
    %v16 = vld [vmem:[%s0] sm:$0xf]
    %v17 = vld [vmem:[%s0 + $0x8] sm:$0xf]
    %v18 = vld [vmem:[%s0 + $0x10] sm:$0xf]
    %v19 = vld [vmem:[%s0 + $0x18] sm:$0xf]
    %v20 = vld [vmem:[%s0 + $0x20] sm:$0xf]
    %v21 = vld [vmem:[%s0 + $0x28] sm:$0xf]
    %v22 = vld [vmem:[%s0 + $0x30] sm:$0xf]
    %v23 = vld [vmem:[%s0 + $0x38] sm:$0xf]
    %v24 = vld [vmem:[%s0 + $0x48] sm:$0xf]
    %v25 = vld [vmem:[%s0 + $0x50] sm:$0xf]
    %v26 = vld [vmem:[%s0 + $0x58] sm:$0xf]
    %v27 = vld [vmem:[%s0 + $0x60] sm:$0xf]
    %v28 = vld [vmem:[%s0 + $0x68] sm:$0xf]
    %v29 = vld [vmem:[%s0 + $0x70] sm:$0xf]
    %v30 = vld [vmem:[%s0 + $0x78] sm:$0xf]
    %v31 = vld [vmem:[%s0 + $0x80] sm:$0xf]
    %vm32 = vcmask 125952
    %33 = vst.msk [vmem:[#allocation2] sm:$0xf] %vm32, %v16
    %34 = vst.msk [vmem:[#allocation2 + $0x8] sm:$0xf] %vm32, %v17
    %35 = vst.msk [vmem:[#allocation2 + $0x10] sm:$0xf] %vm32, %v18
    %36 = vst.msk [vmem:[#allocation2 + $0x18] sm:$0xf] %vm32, %v19
    %37 = vst.msk [vmem:[#allocation2 + $0x20] sm:$0xf] %vm32, %v20
    %38 = vst.msk [vmem:[#allocation2 + $0x28] sm:$0xf] %vm32, %v21
    %39 = vst.msk [vmem:[#allocation2 + $0x30] sm:$0xf] %vm32, %v22
    %40 = vst.msk [vmem:[#allocation2 + $0x38] sm:$0xf] %vm32, %v23
    %41 = vst.msk [vmem:[#allocation2 + $0x40] sm:$0xf] %vm32, %v24
    %42 = vst.msk [vmem:[#allocation2 + $0x48] sm:$0xf] %vm32, %v25
    %43 = vst.msk [vmem:[#allocation2 + $0x50] sm:$0xf] %vm32, %v26
    %44 = vst.msk [vmem:[#allocation2 + $0x58] sm:$0xf] %vm32, %v27
    %45 = vst.msk [vmem:[#allocation2 + $0x60] sm:$0xf] %vm32, %v28
    %46 = vst.msk [vmem:[#allocation2 + $0x68] sm:$0xf] %vm32, %v29
    %47 = vst.msk [vmem:[#allocation2 + $0x70] sm:$0xf] %vm32, %v30
    %48 = vst.msk [vmem:[#allocation2 + $0x78] sm:$0xf] %vm32, %v31
    %s49 = scalar_lea.vmem %s0, 144
    %v50 = vld [vmem:[%s49] sm:$0xf]
    %v51 = vld [vmem:[%s49 + $0x8] sm:$0xf]
    %v52 = vld [vmem:[%s49 + $0x10] sm:$0xf]
    %v53 = vld [vmem:[%s49 + $0x18] sm:$0xf]
    %v54 = vld [vmem:[%s49 + $0x20] sm:$0xf]
    %v55 = vld [vmem:[%s49 + $0x28] sm:$0xf]
    %v56 = vld [vmem:[%s49 + $0x30] sm:$0xf]
    %v57 = vld [vmem:[%s49 + $0x38] sm:$0xf]
    %v58 = vld [vmem:[%s49 + $0x48] sm:$0xf]
    %v59 = vld [vmem:[%s49 + $0x50] sm:$0xf]
    %v60 = vld [vmem:[%s49 + $0x58] sm:$0xf]
    %v61 = vld [vmem:[%s49 + $0x60] sm:$0xf]
    %v62 = vld [vmem:[%s49 + $0x68] sm:$0xf]
    %v63 = vld [vmem:[%s49 + $0x70] sm:$0xf]
    %v64 = vld [vmem:[%s49 + $0x78] sm:$0xf]
    %v65 = vld [vmem:[%s49 + $0x80] sm:$0xf]
    %82 = vrot.lane.b32.xlu0 %v50, 16
    %v83 = vpop.permute.xlu0 %82
    %84 = vrot.lane.b32.xlu0 %v51, 16
    %v85 = vpop.permute.xlu0 %84
    %86 = vrot.lane.b32.xlu0 %v52, 16
    %v87 = vpop.permute.xlu0 %86
    %88 = vrot.lane.b32.xlu0 %v53, 16
    %v89 = vpop.permute.xlu0 %88
    %90 = vrot.lane.b32.xlu0 %v54, 16
    %v91 = vpop.permute.xlu0 %90
    %92 = vrot.lane.b32.xlu0 %v55, 16
    %v93 = vpop.permute.xlu0 %92
    %94 = vrot.lane.b32.xlu0 %v56, 16
    %v95 = vpop.permute.xlu0 %94
    %96 = vrot.lane.b32.xlu0 %v57, 16
    %v97 = vpop.permute.xlu0 %96
    %98 = vrot.lane.b32.xlu0 %v58, 16
    %v99 = vpop.permute.xlu0 %98
    %100 = vrot.lane.b32.xlu0 %v59, 16
    %v101 = vpop.permute.xlu0 %100
    %102 = vrot.lane.b32.xlu0 %v60, 16
    %v103 = vpop.permute.xlu0 %102
    %104 = vrot.lane.b32.xlu0 %v61, 16
    %v105 = vpop.permute.xlu0 %104
    %106 = vrot.lane.b32.xlu0 %v62, 16
    %v107 = vpop.permute.xlu0 %106
    %108 = vrot.lane.b32.xlu0 %v63, 16
    %v109 = vpop.permute.xlu0 %108
    %110 = vrot.lane.b32.xlu0 %v64, 16
    %v111 = vpop.permute.xlu0 %110
    %112 = vrot.lane.b32.xlu0 %v65, 16
    %v113 = vpop.permute.xlu0 %112
    %vm130 = vcmask 257152
    %131 = vst.msk [vmem:[#allocation2] sm:$0xf] %vm130, %v83
    %132 = vst.msk [vmem:[#allocation2 + $0x8] sm:$0xf] %vm130, %v85
    %133 = vst.msk [vmem:[#allocation2 + $0x10] sm:$0xf] %vm130, %v87
    %134 = vst.msk [vmem:[#allocation2 + $0x18] sm:$0xf] %vm130, %v89
    %135 = vst.msk [vmem:[#allocation2 + $0x20] sm:$0xf] %vm130, %v91
    %136 = vst.msk [vmem:[#allocation2 + $0x28] sm:$0xf] %vm130, %v93
    %137 = vst.msk [vmem:[#allocation2 + $0x30] sm:$0xf] %vm130, %v95
    %138 = vst.msk [vmem:[#allocation2 + $0x38] sm:$0xf] %vm130, %v97
    %139 = vst.msk [vmem:[#allocation2 + $0x40] sm:$0xf] %vm130, %v99
    %140 = vst.msk [vmem:[#allocation2 + $0x48] sm:$0xf] %vm130, %v101
    %141 = vst.msk [vmem:[#allocation2 + $0x50] sm:$0xf] %vm130, %v103
    %142 = vst.msk [vmem:[#allocation2 + $0x58] sm:$0xf] %vm130, %v105
    %143 = vst.msk [vmem:[#allocation2 + $0x60] sm:$0xf] %vm130, %v107
    %144 = vst.msk [vmem:[#allocation2 + $0x68] sm:$0xf] %vm130, %v109
    %145 = vst.msk [vmem:[#allocation2 + $0x70] sm:$0xf] %vm130, %v111
    %146 = vst.msk [vmem:[#allocation2 + $0x78] sm:$0xf] %vm130, %v113
    %v147 = vld [vmem:[%s0] sm:$0xf]
    %v148 = vld [vmem:[%s0 + $0x4] sm:$0x1]
    %v149 = vld [vmem:[%s0 + $0x8] sm:$0xf]
    %v150 = vld [vmem:[%s0 + $0xc] sm:$0x1]
    %v151 = vld [vmem:[%s0 + $0x10] sm:$0xf]
    %v152 = vld [vmem:[%s0 + $0x14] sm:$0x1]
    %v153 = vld [vmem:[%s0 + $0x18] sm:$0xf]
    %v154 = vld [vmem:[%s0 + $0x1c] sm:$0x1]
    %v155 = vld [vmem:[%s0 + $0x20] sm:$0xf]
    %v156 = vld [vmem:[%s0 + $0x24] sm:$0x1]
    %v157 = vld [vmem:[%s0 + $0x28] sm:$0xf]
    %v158 = vld [vmem:[%s0 + $0x2c] sm:$0x1]
    %v159 = vld [vmem:[%s0 + $0x30] sm:$0xf]
    %v160 = vld [vmem:[%s0 + $0x34] sm:$0x1]
    %v161 = vld [vmem:[%s0 + $0x38] sm:$0xf]
    %v162 = vld [vmem:[%s0 + $0x3c] sm:$0x1]
    %v163 = vld [vmem:[%s0 + $0x48] sm:$0xf]
    %v164 = vld [vmem:[%s0 + $0x4c] sm:$0x1]
    %v165 = vld [vmem:[%s0 + $0x50] sm:$0xf]
    %v166 = vld [vmem:[%s0 + $0x54] sm:$0x1]
    %v167 = vld [vmem:[%s0 + $0x58] sm:$0xf]
    %v168 = vld [vmem:[%s0 + $0x5c] sm:$0x1]
    %v169 = vld [vmem:[%s0 + $0x60] sm:$0xf]
    %v170 = vld [vmem:[%s0 + $0x64] sm:$0x1]
    %v171 = vld [vmem:[%s0 + $0x68] sm:$0xf]
    %v172 = vld [vmem:[%s0 + $0x6c] sm:$0x1]
    %v173 = vld [vmem:[%s0 + $0x70] sm:$0xf]
    %v174 = vld [vmem:[%s0 + $0x74] sm:$0x1]
    %v175 = vld [vmem:[%s0 + $0x78] sm:$0xf]
    %v176 = vld [vmem:[%s0 + $0x7c] sm:$0x1]
    %v177 = vld [vmem:[%s0 + $0x80] sm:$0xf]
    %v178 = vld [vmem:[%s0 + $0x84] sm:$0x1]
    %vm179 = vsmask.f32 3328
    %vm180 = vsmask.f32 7440
    %vm181 = vmor %vm179, %vm180
    %v183 = vshrl.u32 %v147, 16
    %v185 = vrot.slane %v183, 4
    %v186 = vshll.u32 %v147, 16
    %v188 = vrot.slane %v186, 5
    %v189 = vor.u32 %v185, %v188
    %v190 = vrot.slane %v189, 4
    %v192 = vshll.u32 %v148, 16
    %v194 = vrot.slane %v192, 5
    %v195 = vsel %vm181, %v190, %v194
    %v197 = vshrl.u32 %v149, 16
    %v199 = vrot.slane %v197, 4
    %v200 = vshll.u32 %v149, 16
    %v202 = vrot.slane %v200, 5
    %v203 = vor.u32 %v199, %v202
    %v204 = vrot.slane %v203, 4
    %v206 = vshll.u32 %v150, 16
    %v208 = vrot.slane %v206, 5
    %v209 = vsel %vm181, %v204, %v208
    %v211 = vshrl.u32 %v151, 16
    %v213 = vrot.slane %v211, 4
    %v214 = vshll.u32 %v151, 16
    %v216 = vrot.slane %v214, 5
    %v217 = vor.u32 %v213, %v216
    %v218 = vrot.slane %v217, 4
    %v220 = vshll.u32 %v152, 16
    %v222 = vrot.slane %v220, 5
    %v223 = vsel %vm181, %v218, %v222
    %v225 = vshrl.u32 %v153, 16
    %v227 = vrot.slane %v225, 4
    %v228 = vshll.u32 %v153, 16
    %v230 = vrot.slane %v228, 5
    %v231 = vor.u32 %v227, %v230
    %v232 = vrot.slane %v231, 4
    %v234 = vshll.u32 %v154, 16
    %v236 = vrot.slane %v234, 5
    %v237 = vsel %vm181, %v232, %v236
    %v239 = vshrl.u32 %v155, 16
    %v241 = vrot.slane %v239, 4
    %v242 = vshll.u32 %v155, 16
    %v244 = vrot.slane %v242, 5
    %v245 = vor.u32 %v241, %v244
    %v246 = vrot.slane %v245, 4
    %v248 = vshll.u32 %v156, 16
    %v250 = vrot.slane %v248, 5
    %v251 = vsel %vm181, %v246, %v250
    %v253 = vshrl.u32 %v157, 16
    %v255 = vrot.slane %v253, 4
    %v256 = vshll.u32 %v157, 16
    %v258 = vrot.slane %v256, 5
    %v259 = vor.u32 %v255, %v258
    %v260 = vrot.slane %v259, 4
    %v262 = vshll.u32 %v158, 16
    %v264 = vrot.slane %v262, 5
    %v265 = vsel %vm181, %v260, %v264
    %v267 = vshrl.u32 %v159, 16
    %v269 = vrot.slane %v267, 4
    %v270 = vshll.u32 %v159, 16
    %v272 = vrot.slane %v270, 5
    %v273 = vor.u32 %v269, %v272
    %v274 = vrot.slane %v273, 4
    %v276 = vshll.u32 %v160, 16
    %v278 = vrot.slane %v276, 5
    %v279 = vsel %vm181, %v274, %v278
    %v281 = vshrl.u32 %v161, 16
    %v283 = vrot.slane %v281, 4
    %v284 = vshll.u32 %v161, 16
    %v286 = vrot.slane %v284, 5
    %v287 = vor.u32 %v283, %v286
    %v288 = vrot.slane %v287, 4
    %v290 = vshll.u32 %v162, 16
    %v292 = vrot.slane %v290, 5
    %v293 = vsel %vm181, %v288, %v292
    %v295 = vshrl.u32 %v163, 16
    %v297 = vrot.slane %v295, 4
    %v298 = vshll.u32 %v163, 16
    %v300 = vrot.slane %v298, 5
    %v301 = vor.u32 %v297, %v300
    %v302 = vrot.slane %v301, 4
    %v304 = vshll.u32 %v164, 16
    %v306 = vrot.slane %v304, 5
    %v307 = vsel %vm181, %v302, %v306
    %v309 = vshrl.u32 %v165, 16
    %v311 = vrot.slane %v309, 4
    %v312 = vshll.u32 %v165, 16
    %v314 = vrot.slane %v312, 5
    %v315 = vor.u32 %v311, %v314
    %v316 = vrot.slane %v315, 4
    %v318 = vshll.u32 %v166, 16
    %v320 = vrot.slane %v318, 5
    %v321 = vsel %vm181, %v316, %v320
    %v323 = vshrl.u32 %v167, 16
    %v325 = vrot.slane %v323, 4
    %v326 = vshll.u32 %v167, 16
    %v328 = vrot.slane %v326, 5
    %v329 = vor.u32 %v325, %v328
    %v330 = vrot.slane %v329, 4
    %v332 = vshll.u32 %v168, 16
    %v334 = vrot.slane %v332, 5
    %v335 = vsel %vm181, %v330, %v334
    %v337 = vshrl.u32 %v169, 16
    %v339 = vrot.slane %v337, 4
    %v340 = vshll.u32 %v169, 16
    %v342 = vrot.slane %v340, 5
    %v343 = vor.u32 %v339, %v342
    %v344 = vrot.slane %v343, 4
    %v346 = vshll.u32 %v170, 16
    %v348 = vrot.slane %v346, 5
    %v349 = vsel %vm181, %v344, %v348
    %v351 = vshrl.u32 %v171, 16
    %v353 = vrot.slane %v351, 4
    %v354 = vshll.u32 %v171, 16
    %v356 = vrot.slane %v354, 5
    %v357 = vor.u32 %v353, %v356
    %v358 = vrot.slane %v357, 4
    %v360 = vshll.u32 %v172, 16
    %v362 = vrot.slane %v360, 5
    %v363 = vsel %vm181, %v358, %v362
    %v365 = vshrl.u32 %v173, 16
    %v367 = vrot.slane %v365, 4
    %v368 = vshll.u32 %v173, 16
    %v370 = vrot.slane %v368, 5
    %v371 = vor.u32 %v367, %v370
    %v372 = vrot.slane %v371, 4
    %v374 = vshll.u32 %v174, 16
    %v376 = vrot.slane %v374, 5
    %v377 = vsel %vm181, %v372, %v376
    %v379 = vshrl.u32 %v175, 16
    %v381 = vrot.slane %v379, 4
    %v382 = vshll.u32 %v175, 16
    %v384 = vrot.slane %v382, 5
    %v385 = vor.u32 %v381, %v384
    %v386 = vrot.slane %v385, 4
    %v388 = vshll.u32 %v176, 16
    %v390 = vrot.slane %v388, 5
    %v391 = vsel %vm181, %v386, %v390
    %v393 = vshrl.u32 %v177, 16
    %v395 = vrot.slane %v393, 4
    %v396 = vshll.u32 %v177, 16
    %v398 = vrot.slane %v396, 5
    %v399 = vor.u32 %v395, %v398
    %v400 = vrot.slane %v399, 4
    %v402 = vshll.u32 %v178, 16
    %v404 = vrot.slane %v402, 5
    %v405 = vsel %vm181, %v400, %v404
    %406 = vrot.lane.b32.xlu0 %v195, 32
    %v407 = vpop.permute.xlu0 %406
    %408 = vrot.lane.b32.xlu0 %v209, 32
    %v409 = vpop.permute.xlu0 %408
    %410 = vrot.lane.b32.xlu0 %v223, 32
    %v411 = vpop.permute.xlu0 %410
    %412 = vrot.lane.b32.xlu0 %v237, 32
    %v413 = vpop.permute.xlu0 %412
    %414 = vrot.lane.b32.xlu0 %v251, 32
    %v415 = vpop.permute.xlu0 %414
    %416 = vrot.lane.b32.xlu0 %v265, 32
    %v417 = vpop.permute.xlu0 %416
    %418 = vrot.lane.b32.xlu0 %v279, 32
    %v419 = vpop.permute.xlu0 %418
    %420 = vrot.lane.b32.xlu0 %v293, 32
    %v421 = vpop.permute.xlu0 %420
    %422 = vrot.lane.b32.xlu0 %v307, 32
    %v423 = vpop.permute.xlu0 %422
    %424 = vrot.lane.b32.xlu0 %v321, 32
    %v425 = vpop.permute.xlu0 %424
    %426 = vrot.lane.b32.xlu0 %v335, 32
    %v427 = vpop.permute.xlu0 %426
    %428 = vrot.lane.b32.xlu0 %v349, 32
    %v429 = vpop.permute.xlu0 %428
    %430 = vrot.lane.b32.xlu0 %v363, 32
    %v431 = vpop.permute.xlu0 %430
    %432 = vrot.lane.b32.xlu0 %v377, 32
    %v433 = vpop.permute.xlu0 %432
    %434 = vrot.lane.b32.xlu0 %v391, 32
    %v435 = vpop.permute.xlu0 %434
    %436 = vrot.lane.b32.xlu0 %v405, 32
    %v437 = vpop.permute.xlu0 %436
    %vm454 = vcmask 388352
    %455 = vst.msk [vmem:[#allocation2] sm:$0xf] %vm454, %v407
    %456 = vst.msk [vmem:[#allocation2 + $0x8] sm:$0xf] %vm454, %v409
    %457 = vst.msk [vmem:[#allocation2 + $0x10] sm:$0xf] %vm454, %v411
    %458 = vst.msk [vmem:[#allocation2 + $0x18] sm:$0xf] %vm454, %v413
    %459 = vst.msk [vmem:[#allocation2 + $0x20] sm:$0xf] %vm454, %v415
    %460 = vst.msk [vmem:[#allocation2 + $0x28] sm:$0xf] %vm454, %v417
    %461 = vst.msk [vmem:[#allocation2 + $0x30] sm:$0xf] %vm454, %v419
    %462 = vst.msk [vmem:[#allocation2 + $0x38] sm:$0xf] %vm454, %v421
    %463 = vst.msk [vmem:[#allocation2 + $0x40] sm:$0xf] %vm454, %v423
    %464 = vst.msk [vmem:[#allocation2 + $0x48] sm:$0xf] %vm454, %v425
    %465 = vst.msk [vmem:[#allocation2 + $0x50] sm:$0xf] %vm454, %v427
    %466 = vst.msk [vmem:[#allocation2 + $0x58] sm:$0xf] %vm454, %v429
    %467 = vst.msk [vmem:[#allocation2 + $0x60] sm:$0xf] %vm454, %v431
    %468 = vst.msk [vmem:[#allocation2 + $0x68] sm:$0xf] %vm454, %v433
    %469 = vst.msk [vmem:[#allocation2 + $0x70] sm:$0xf] %vm454, %v435
    %470 = vst.msk [vmem:[#allocation2 + $0x78] sm:$0xf] %vm454, %v437
    %s471 = scalar_lea.vmem %s0, 288
    %v472 = vld [vmem:[%s471] sm:$0xf]
    %v473 = vld [vmem:[%s471 + $0x8] sm:$0xf]
    %v474 = vld [vmem:[%s471 + $0x10] sm:$0xf]
    %v475 = vld [vmem:[%s471 + $0x18] sm:$0xf]
    %v476 = vld [vmem:[%s471 + $0x20] sm:$0xf]
    %v477 = vld [vmem:[%s471 + $0x28] sm:$0xf]
    %v478 = vld [vmem:[%s471 + $0x30] sm:$0xf]
    %v479 = vld [vmem:[%s471 + $0x38] sm:$0xf]
    %v480 = vld [vmem:[%s471 + $0x48] sm:$0xf]
    %v481 = vld [vmem:[%s471 + $0x50] sm:$0xf]
    %v482 = vld [vmem:[%s471 + $0x58] sm:$0xf]
    %v483 = vld [vmem:[%s471 + $0x60] sm:$0xf]
    %v484 = vld [vmem:[%s471 + $0x68] sm:$0xf]
    %v485 = vld [vmem:[%s471 + $0x70] sm:$0xf]
    %v486 = vld [vmem:[%s471 + $0x78] sm:$0xf]
    %v487 = vld [vmem:[%s471 + $0x80] sm:$0xf]
    %504 = vrot.lane.b32.xlu0 %v472, 48
    %v505 = vpop.permute.xlu0 %504
    %506 = vrot.lane.b32.xlu0 %v473, 48
    %v507 = vpop.permute.xlu0 %506
    %508 = vrot.lane.b32.xlu0 %v474, 48
    %v509 = vpop.permute.xlu0 %508
    %510 = vrot.lane.b32.xlu0 %v475, 48
    %v511 = vpop.permute.xlu0 %510
    %512 = vrot.lane.b32.xlu0 %v476, 48
    %v513 = vpop.permute.xlu0 %512
    %514 = vrot.lane.b32.xlu0 %v477, 48
    %v515 = vpop.permute.xlu0 %514
    %516 = vrot.lane.b32.xlu0 %v478, 48
    %v517 = vpop.permute.xlu0 %516
    %518 = vrot.lane.b32.xlu0 %v479, 48
    %v519 = vpop.permute.xlu0 %518
    %520 = vrot.lane.b32.xlu0 %v480, 48
    %v521 = vpop.permute.xlu0 %520
    %522 = vrot.lane.b32.xlu0 %v481, 48
    %v523 = vpop.permute.xlu0 %522
    %524 = vrot.lane.b32.xlu0 %v482, 48
    %v525 = vpop.permute.xlu0 %524
    %526 = vrot.lane.b32.xlu0 %v483, 48
    %v527 = vpop.permute.xlu0 %526
    %528 = vrot.lane.b32.xlu0 %v484, 48
    %v529 = vpop.permute.xlu0 %528
    %530 = vrot.lane.b32.xlu0 %v485, 48
    %v531 = vpop.permute.xlu0 %530
    %532 = vrot.lane.b32.xlu0 %v486, 48
    %v533 = vpop.permute.xlu0 %532
    %534 = vrot.lane.b32.xlu0 %v487, 48
    %v535 = vpop.permute.xlu0 %534
    %vm552 = vcmask 519552
    %553 = vst.msk [vmem:[#allocation2] sm:$0xf] %vm552, %v505
    %554 = vst.msk [vmem:[#allocation2 + $0x8] sm:$0xf] %vm552, %v507
    %555 = vst.msk [vmem:[#allocation2 + $0x10] sm:$0xf] %vm552, %v509
    %556 = vst.msk [vmem:[#allocation2 + $0x18] sm:$0xf] %vm552, %v511
    %557 = vst.msk [vmem:[#allocation2 + $0x20] sm:$0xf] %vm552, %v513
    %558 = vst.msk [vmem:[#allocation2 + $0x28] sm:$0xf] %vm552, %v515
    %559 = vst.msk [vmem:[#allocation2 + $0x30] sm:$0xf] %vm552, %v517
    %560 = vst.msk [vmem:[#allocation2 + $0x38] sm:$0xf] %vm552, %v519
    %561 = vst.msk [vmem:[#allocation2 + $0x40] sm:$0xf] %vm552, %v521
    %562 = vst.msk [vmem:[#allocation2 + $0x48] sm:$0xf] %vm552, %v523
    %563 = vst.msk [vmem:[#allocation2 + $0x50] sm:$0xf] %vm552, %v525
    %564 = vst.msk [vmem:[#allocation2 + $0x58] sm:$0xf] %vm552, %v527
    %565 = vst.msk [vmem:[#allocation2 + $0x60] sm:$0xf] %vm552, %v529
    %566 = vst.msk [vmem:[#allocation2 + $0x68] sm:$0xf] %vm552, %v531
    %567 = vst.msk [vmem:[#allocation2 + $0x70] sm:$0xf] %vm552, %v533
    %568 = vst.msk [vmem:[#allocation2 + $0x78] sm:$0xf] %vm552, %v535
    %s569 = scalar_lea.vmem %s0, 432
    %v570 = vld [vmem:[%s569] sm:$0xf]
    %v571 = vld [vmem:[%s569 + $0x8] sm:$0xf]
    %v572 = vld [vmem:[%s569 + $0x10] sm:$0xf]
    %v573 = vld [vmem:[%s569 + $0x18] sm:$0xf]
    %v574 = vld [vmem:[%s569 + $0x20] sm:$0xf]
    %v575 = vld [vmem:[%s569 + $0x28] sm:$0xf]
    %v576 = vld [vmem:[%s569 + $0x30] sm:$0xf]
    %v577 = vld [vmem:[%s569 + $0x38] sm:$0xf]
    %v578 = vld [vmem:[%s569 + $0x48] sm:$0xf]
    %v579 = vld [vmem:[%s569 + $0x50] sm:$0xf]
    %v580 = vld [vmem:[%s569 + $0x58] sm:$0xf]
    %v581 = vld [vmem:[%s569 + $0x60] sm:$0xf]
    %v582 = vld [vmem:[%s569 + $0x68] sm:$0xf]
    %v583 = vld [vmem:[%s569 + $0x70] sm:$0xf]
    %v584 = vld [vmem:[%s569 + $0x78] sm:$0xf]
    %v585 = vld [vmem:[%s569 + $0x80] sm:$0xf]
    %602 = vrot.lane.b32.xlu0 %v570, 64
    %v603 = vpop.permute.xlu0 %602
    %604 = vrot.lane.b32.xlu0 %v571, 64
    %v605 = vpop.permute.xlu0 %604
    %606 = vrot.lane.b32.xlu0 %v572, 64
    %v607 = vpop.permute.xlu0 %606
    %608 = vrot.lane.b32.xlu0 %v573, 64
    %v609 = vpop.permute.xlu0 %608
    %610 = vrot.lane.b32.xlu0 %v574, 64
    %v611 = vpop.permute.xlu0 %610
    %612 = vrot.lane.b32.xlu0 %v575, 64
    %v613 = vpop.permute.xlu0 %612
    %614 = vrot.lane.b32.xlu0 %v576, 64
    %v615 = vpop.permute.xlu0 %614
    %616 = vrot.lane.b32.xlu0 %v577, 64
    %v617 = vpop.permute.xlu0 %616
    %618 = vrot.lane.b32.xlu0 %v578, 64
    %v619 = vpop.permute.xlu0 %618
    %620 = vrot.lane.b32.xlu0 %v579, 64
    %v621 = vpop.permute.xlu0 %620
    %622 = vrot.lane.b32.xlu0 %v580, 64
    %v623 = vpop.permute.xlu0 %622
    %624 = vrot.lane.b32.xlu0 %v581, 64
    %v625 = vpop.permute.xlu0 %624
    %626 = vrot.lane.b32.xlu0 %v582, 64
    %v627 = vpop.permute.xlu0 %626
    %628 = vrot.lane.b32.xlu0 %v583, 64
    %v629 = vpop.permute.xlu0 %628
    %630 = vrot.lane.b32.xlu0 %v584, 64
    %v631 = vpop.permute.xlu0 %630
    %632 = vrot.lane.b32.xlu0 %v585, 64
    %v633 = vpop.permute.xlu0 %632
    %vm650 = vcmask 650752
    %651 = vst.msk [vmem:[#allocation2] sm:$0xf] %vm650, %v603
    %652 = vst.msk [vmem:[#allocation2 + $0x8] sm:$0xf] %vm650, %v605
    %653 = vst.msk [vmem:[#allocation2 + $0x10] sm:$0xf] %vm650, %v607
    %654 = vst.msk [vmem:[#allocation2 + $0x18] sm:$0xf] %vm650, %v609
    %655 = vst.msk [vmem:[#allocation2 + $0x20] sm:$0xf] %vm650, %v611
    %656 = vst.msk [vmem:[#allocation2 + $0x28] sm:$0xf] %vm650, %v613
    %657 = vst.msk [vmem:[#allocation2 + $0x30] sm:$0xf] %vm650, %v615
    %658 = vst.msk [vmem:[#allocation2 + $0x38] sm:$0xf] %vm650, %v617
    %659 = vst.msk [vmem:[#allocation2 + $0x40] sm:$0xf] %vm650, %v619
    %660 = vst.msk [vmem:[#allocation2 + $0x48] sm:$0xf] %vm650, %v621
    %661 = vst.msk [vmem:[#allocation2 + $0x50] sm:$0xf] %vm650, %v623
    %662 = vst.msk [vmem:[#allocation2 + $0x58] sm:$0xf] %vm650, %v625
    %663 = vst.msk [vmem:[#allocation2 + $0x60] sm:$0xf] %vm650, %v627
    %664 = vst.msk [vmem:[#allocation2 + $0x68] sm:$0xf] %vm650, %v629
    %665 = vst.msk [vmem:[#allocation2 + $0x70] sm:$0xf] %vm650, %v631
    %666 = vst.msk [vmem:[#allocation2 + $0x78] sm:$0xf] %vm650, %v633
    %v667 = vld [vmem:[%s471] sm:$0xf]
    %v668 = vld [vmem:[%s471 + $0x4] sm:$0x1]
    %v669 = vld [vmem:[%s471 + $0x8] sm:$0xf]
    %v670 = vld [vmem:[%s471 + $0xc] sm:$0x1]
    %v671 = vld [vmem:[%s471 + $0x10] sm:$0xf]
    %v672 = vld [vmem:[%s471 + $0x14] sm:$0x1]
    %v673 = vld [vmem:[%s471 + $0x18] sm:$0xf]
    %v674 = vld [vmem:[%s471 + $0x1c] sm:$0x1]
    %v675 = vld [vmem:[%s471 + $0x20] sm:$0xf]
    %v676 = vld [vmem:[%s471 + $0x24] sm:$0x1]
    %v677 = vld [vmem:[%s471 + $0x28] sm:$0xf]
    %v678 = vld [vmem:[%s471 + $0x2c] sm:$0x1]
    %v679 = vld [vmem:[%s471 + $0x30] sm:$0xf]
    %v680 = vld [vmem:[%s471 + $0x34] sm:$0x1]
    %v681 = vld [vmem:[%s471 + $0x38] sm:$0xf]
    %v682 = vld [vmem:[%s471 + $0x3c] sm:$0x1]
    %v683 = vld [vmem:[%s471 + $0x48] sm:$0xf]
    %v684 = vld [vmem:[%s471 + $0x4c] sm:$0x1]
    %v685 = vld [vmem:[%s471 + $0x50] sm:$0xf]
    %v686 = vld [vmem:[%s471 + $0x54] sm:$0x1]
    %v687 = vld [vmem:[%s471 + $0x58] sm:$0xf]
    %v688 = vld [vmem:[%s471 + $0x5c] sm:$0x1]
    %v689 = vld [vmem:[%s471 + $0x60] sm:$0xf]
    %v690 = vld [vmem:[%s471 + $0x64] sm:$0x1]
    %v691 = vld [vmem:[%s471 + $0x68] sm:$0xf]
    %v692 = vld [vmem:[%s471 + $0x6c] sm:$0x1]
    %v693 = vld [vmem:[%s471 + $0x70] sm:$0xf]
    %v694 = vld [vmem:[%s471 + $0x74] sm:$0x1]
    %v695 = vld [vmem:[%s471 + $0x78] sm:$0xf]
    %v696 = vld [vmem:[%s471 + $0x7c] sm:$0x1]
    %v697 = vld [vmem:[%s471 + $0x80] sm:$0xf]
    %v698 = vld [vmem:[%s471 + $0x84] sm:$0x1]
    %v700 = vshrl.u32 %v667, 16
    %v702 = vrot.slane %v700, 4
    %v703 = vshll.u32 %v667, 16
    %v705 = vrot.slane %v703, 5
    %v706 = vor.u32 %v702, %v705
    %v707 = vrot.slane %v706, 4
    %v709 = vshll.u32 %v668, 16
    %v711 = vrot.slane %v709, 5
    %v712 = vsel %vm181, %v707, %v711
    %v714 = vshrl.u32 %v669, 16
    %v716 = vrot.slane %v714, 4
    %v717 = vshll.u32 %v669, 16
    %v719 = vrot.slane %v717, 5
    %v720 = vor.u32 %v716, %v719
    %v721 = vrot.slane %v720, 4
    %v723 = vshll.u32 %v670, 16
    %v725 = vrot.slane %v723, 5
    %v726 = vsel %vm181, %v721, %v725
    %v728 = vshrl.u32 %v671, 16
    %v730 = vrot.slane %v728, 4
    %v731 = vshll.u32 %v671, 16
    %v733 = vrot.slane %v731, 5
    %v734 = vor.u32 %v730, %v733
    %v735 = vrot.slane %v734, 4
    %v737 = vshll.u32 %v672, 16
    %v739 = vrot.slane %v737, 5
    %v740 = vsel %vm181, %v735, %v739
    %v742 = vshrl.u32 %v673, 16
    %v744 = vrot.slane %v742, 4
    %v745 = vshll.u32 %v673, 16
    %v747 = vrot.slane %v745, 5
    %v748 = vor.u32 %v744, %v747
    %v749 = vrot.slane %v748, 4
    %v751 = vshll.u32 %v674, 16
    %v753 = vrot.slane %v751, 5
    %v754 = vsel %vm181, %v749, %v753
    %v756 = vshrl.u32 %v675, 16
    %v758 = vrot.slane %v756, 4
    %v759 = vshll.u32 %v675, 16
    %v761 = vrot.slane %v759, 5
    %v762 = vor.u32 %v758, %v761
    %v763 = vrot.slane %v762, 4
    %v765 = vshll.u32 %v676, 16
    %v767 = vrot.slane %v765, 5
    %v768 = vsel %vm181, %v763, %v767
    %v770 = vshrl.u32 %v677, 16
    %v772 = vrot.slane %v770, 4
    %v773 = vshll.u32 %v677, 16
    %v775 = vrot.slane %v773, 5
    %v776 = vor.u32 %v772, %v775
    %v777 = vrot.slane %v776, 4
    %v779 = vshll.u32 %v678, 16
    %v781 = vrot.slane %v779, 5
    %v782 = vsel %vm181, %v777, %v781
    %v784 = vshrl.u32 %v679, 16
    %v786 = vrot.slane %v784, 4
    %v787 = vshll.u32 %v679, 16
    %v789 = vrot.slane %v787, 5
    %v790 = vor.u32 %v786, %v789
    %v791 = vrot.slane %v790, 4
    %v793 = vshll.u32 %v680, 16
    %v795 = vrot.slane %v793, 5
    %v796 = vsel %vm181, %v791, %v795
    %v798 = vshrl.u32 %v681, 16
    %v800 = vrot.slane %v798, 4
    %v801 = vshll.u32 %v681, 16
    %v803 = vrot.slane %v801, 5
    %v804 = vor.u32 %v800, %v803
    %v805 = vrot.slane %v804, 4
    %v807 = vshll.u32 %v682, 16
    %v809 = vrot.slane %v807, 5
    %v810 = vsel %vm181, %v805, %v809
    %v812 = vshrl.u32 %v683, 16
    %v814 = vrot.slane %v812, 4
    %v815 = vshll.u32 %v683, 16
    %v817 = vrot.slane %v815, 5
    %v818 = vor.u32 %v814, %v817
    %v819 = vrot.slane %v818, 4
    %v821 = vshll.u32 %v684, 16
    %v823 = vrot.slane %v821, 5
    %v824 = vsel %vm181, %v819, %v823
    %v826 = vshrl.u32 %v685, 16
    %v828 = vrot.slane %v826, 4
    %v829 = vshll.u32 %v685, 16
    %v831 = vrot.slane %v829, 5
    %v832 = vor.u32 %v828, %v831
    %v833 = vrot.slane %v832, 4
    %v835 = vshll.u32 %v686, 16
    %v837 = vrot.slane %v835, 5
    %v838 = vsel %vm181, %v833, %v837
    %v840 = vshrl.u32 %v687, 16
    %v842 = vrot.slane %v840, 4
    %v843 = vshll.u32 %v687, 16
    %v845 = vrot.slane %v843, 5
    %v846 = vor.u32 %v842, %v845
    %v847 = vrot.slane %v846, 4
    %v849 = vshll.u32 %v688, 16
    %v851 = vrot.slane %v849, 5
    %v852 = vsel %vm181, %v847, %v851
    %v854 = vshrl.u32 %v689, 16
    %v856 = vrot.slane %v854, 4
    %v857 = vshll.u32 %v689, 16
    %v859 = vrot.slane %v857, 5
    %v860 = vor.u32 %v856, %v859
    %v861 = vrot.slane %v860, 4
    %v863 = vshll.u32 %v690, 16
    %v865 = vrot.slane %v863, 5
    %v866 = vsel %vm181, %v861, %v865
    %v868 = vshrl.u32 %v691, 16
    %v870 = vrot.slane %v868, 4
    %v871 = vshll.u32 %v691, 16
    %v873 = vrot.slane %v871, 5
    %v874 = vor.u32 %v870, %v873
    %v875 = vrot.slane %v874, 4
    %v877 = vshll.u32 %v692, 16
    %v879 = vrot.slane %v877, 5
    %v880 = vsel %vm181, %v875, %v879
    %v882 = vshrl.u32 %v693, 16
    %v884 = vrot.slane %v882, 4
    %v885 = vshll.u32 %v693, 16
    %v887 = vrot.slane %v885, 5
    %v888 = vor.u32 %v884, %v887
    %v889 = vrot.slane %v888, 4
    %v891 = vshll.u32 %v694, 16
    %v893 = vrot.slane %v891, 5
    %v894 = vsel %vm181, %v889, %v893
    %v896 = vshrl.u32 %v695, 16
    %v898 = vrot.slane %v896, 4
    %v899 = vshll.u32 %v695, 16
    %v901 = vrot.slane %v899, 5
    %v902 = vor.u32 %v898, %v901
    %v903 = vrot.slane %v902, 4
    %v905 = vshll.u32 %v696, 16
    %v907 = vrot.slane %v905, 5
    %v908 = vsel %vm181, %v903, %v907
    %v910 = vshrl.u32 %v697, 16
    %v912 = vrot.slane %v910, 4
    %v913 = vshll.u32 %v697, 16
    %v915 = vrot.slane %v913, 5
    %v916 = vor.u32 %v912, %v915
    %v917 = vrot.slane %v916, 4
    %v919 = vshll.u32 %v698, 16
    %v921 = vrot.slane %v919, 5
    %v922 = vsel %vm181, %v917, %v921
    %923 = vrot.lane.b32.xlu0 %v712, 80
    %v924 = vpop.permute.xlu0 %923
    %925 = vrot.lane.b32.xlu0 %v726, 80
    %v926 = vpop.permute.xlu0 %925
    %927 = vrot.lane.b32.xlu0 %v740, 80
    %v928 = vpop.permute.xlu0 %927
    %929 = vrot.lane.b32.xlu0 %v754, 80
    %v930 = vpop.permute.xlu0 %929
    %931 = vrot.lane.b32.xlu0 %v768, 80
    %v932 = vpop.permute.xlu0 %931
    %933 = vrot.lane.b32.xlu0 %v782, 80
    %v934 = vpop.permute.xlu0 %933
    %935 = vrot.lane.b32.xlu0 %v796, 80
    %v936 = vpop.permute.xlu0 %935
    %937 = vrot.lane.b32.xlu0 %v810, 80
    %v938 = vpop.permute.xlu0 %937
    %939 = vrot.lane.b32.xlu0 %v824, 80
    %v940 = vpop.permute.xlu0 %939
    %941 = vrot.lane.b32.xlu0 %v838, 80
    %v942 = vpop.permute.xlu0 %941
    %943 = vrot.lane.b32.xlu0 %v852, 80
    %v944 = vpop.permute.xlu0 %943
    %945 = vrot.lane.b32.xlu0 %v866, 80
    %v946 = vpop.permute.xlu0 %945
    %947 = vrot.lane.b32.xlu0 %v880, 80
    %v948 = vpop.permute.xlu0 %947
    %949 = vrot.lane.b32.xlu0 %v894, 80
    %v950 = vpop.permute.xlu0 %949
    %951 = vrot.lane.b32.xlu0 %v908, 80
    %v952 = vpop.permute.xlu0 %951
    %953 = vrot.lane.b32.xlu0 %v922, 80
    %v954 = vpop.permute.xlu0 %953
    %vm971 = vcmask 781952
    %972 = vst.msk [vmem:[#allocation2] sm:$0xf] %vm971, %v924
    %973 = vst.msk [vmem:[#allocation2 + $0x8] sm:$0xf] %vm971, %v926
    %974 = vst.msk [vmem:[#allocation2 + $0x10] sm:$0xf] %vm971, %v928
    %975 = vst.msk [vmem:[#allocation2 + $0x18] sm:$0xf] %vm971, %v930
    %976 = vst.msk [vmem:[#allocation2 + $0x20] sm:$0xf] %vm971, %v932
    %977 = vst.msk [vmem:[#allocation2 + $0x28] sm:$0xf] %vm971, %v934
    %978 = vst.msk [vmem:[#allocation2 + $0x30] sm:$0xf] %vm971, %v936
    %979 = vst.msk [vmem:[#allocation2 + $0x38] sm:$0xf] %vm971, %v938
    %980 = vst.msk [vmem:[#allocation2 + $0x40] sm:$0xf] %vm971, %v940
    %981 = vst.msk [vmem:[#allocation2 + $0x48] sm:$0xf] %vm971, %v942
    %982 = vst.msk [vmem:[#allocation2 + $0x50] sm:$0xf] %vm971, %v944
    %983 = vst.msk [vmem:[#allocation2 + $0x58] sm:$0xf] %vm971, %v946
    %984 = vst.msk [vmem:[#allocation2 + $0x60] sm:$0xf] %vm971, %v948
    %985 = vst.msk [vmem:[#allocation2 + $0x68] sm:$0xf] %vm971, %v950
    %986 = vst.msk [vmem:[#allocation2 + $0x70] sm:$0xf] %vm971, %v952
    %987 = vst.msk [vmem:[#allocation2 + $0x78] sm:$0xf] %vm971, %v954
    %s988 = scalar_lea.vmem %s0, 8
    %v989 = vld [vmem:[%s988] sm:$0xf]
    %v990 = vld [vmem:[%s988 + $0x8] sm:$0xf]
    %v991 = vld [vmem:[%s988 + $0x10] sm:$0xf]
    %v992 = vld [vmem:[%s988 + $0x18] sm:$0xf]
    %v993 = vld [vmem:[%s988 + $0x20] sm:$0xf]
    %v994 = vld [vmem:[%s988 + $0x28] sm:$0xf]
    %v995 = vld [vmem:[%s988 + $0x30] sm:$0xf]
    %v996 = vld [vmem:[%s988 + $0x38] sm:$0xf]
    %v997 = vld [vmem:[%s988 + $0x48] sm:$0xf]
    %v998 = vld [vmem:[%s988 + $0x50] sm:$0xf]
    %v999 = vld [vmem:[%s988 + $0x58] sm:$0xf]
    %v1000 = vld [vmem:[%s988 + $0x60] sm:$0xf]
    %v1001 = vld [vmem:[%s988 + $0x68] sm:$0xf]
    %v1002 = vld [vmem:[%s988 + $0x70] sm:$0xf]
    %v1003 = vld [vmem:[%s988 + $0x78] sm:$0xf]
    %v1004 = vld [vmem:[%s988 + $0x80] sm:$0xf]
    %1021 = vrot.lane.b32.xlu0 %v989, 96
    %v1022 = vpop.permute.xlu0 %1021
    %1023 = vrot.lane.b32.xlu0 %v990, 96
    %v1024 = vpop.permute.xlu0 %1023
    %1025 = vrot.lane.b32.xlu0 %v991, 96
    %v1026 = vpop.permute.xlu0 %1025
    %1027 = vrot.lane.b32.xlu0 %v992, 96
    %v1028 = vpop.permute.xlu0 %1027
    %1029 = vrot.lane.b32.xlu0 %v993, 96
    %v1030 = vpop.permute.xlu0 %1029
    %1031 = vrot.lane.b32.xlu0 %v994, 96
    %v1032 = vpop.permute.xlu0 %1031
    %1033 = vrot.lane.b32.xlu0 %v995, 96
    %v1034 = vpop.permute.xlu0 %1033
    %1035 = vrot.lane.b32.xlu0 %v996, 96
    %v1036 = vpop.permute.xlu0 %1035
    %1037 = vrot.lane.b32.xlu0 %v997, 96
    %v1038 = vpop.permute.xlu0 %1037
    %1039 = vrot.lane.b32.xlu0 %v998, 96
    %v1040 = vpop.permute.xlu0 %1039
    %1041 = vrot.lane.b32.xlu0 %v999, 96
    %v1042 = vpop.permute.xlu0 %1041
    %1043 = vrot.lane.b32.xlu0 %v1000, 96
    %v1044 = vpop.permute.xlu0 %1043
    %1045 = vrot.lane.b32.xlu0 %v1001, 96
    %v1046 = vpop.permute.xlu0 %1045
    %1047 = vrot.lane.b32.xlu0 %v1002, 96
    %v1048 = vpop.permute.xlu0 %1047
    %1049 = vrot.lane.b32.xlu0 %v1003, 96
    %v1050 = vpop.permute.xlu0 %1049
    %1051 = vrot.lane.b32.xlu0 %v1004, 96
    %v1052 = vpop.permute.xlu0 %1051
    %vm1069 = vcmask 913152
    %1070 = vst.msk [vmem:[#allocation2] sm:$0xf] %vm1069, %v1022
    %1071 = vst.msk [vmem:[#allocation2 + $0x8] sm:$0xf] %vm1069, %v1024
    %1072 = vst.msk [vmem:[#allocation2 + $0x10] sm:$0xf] %vm1069, %v1026
    %1073 = vst.msk [vmem:[#allocation2 + $0x18] sm:$0xf] %vm1069, %v1028
    %1074 = vst.msk [vmem:[#allocation2 + $0x20] sm:$0xf] %vm1069, %v1030
    %1075 = vst.msk [vmem:[#allocation2 + $0x28] sm:$0xf] %vm1069, %v1032
    %1076 = vst.msk [vmem:[#allocation2 + $0x30] sm:$0xf] %vm1069, %v1034
    %1077 = vst.msk [vmem:[#allocation2 + $0x38] sm:$0xf] %vm1069, %v1036
    %1078 = vst.msk [vmem:[#allocation2 + $0x40] sm:$0xf] %vm1069, %v1038
    %1079 = vst.msk [vmem:[#allocation2 + $0x48] sm:$0xf] %vm1069, %v1040
    %1080 = vst.msk [vmem:[#allocation2 + $0x50] sm:$0xf] %vm1069, %v1042
    %1081 = vst.msk [vmem:[#allocation2 + $0x58] sm:$0xf] %vm1069, %v1044
    %1082 = vst.msk [vmem:[#allocation2 + $0x60] sm:$0xf] %vm1069, %v1046
    %1083 = vst.msk [vmem:[#allocation2 + $0x68] sm:$0xf] %vm1069, %v1048
    %1084 = vst.msk [vmem:[#allocation2 + $0x70] sm:$0xf] %vm1069, %v1050
    %1085 = vst.msk [vmem:[#allocation2 + $0x78] sm:$0xf] %vm1069, %v1052
    %s1086 = scalar_lea.vmem %s0, 152
    %v1087 = vld [vmem:[%s1086] sm:$0xf]
    %v1088 = vld [vmem:[%s1086 + $0x8] sm:$0xf]
    %v1089 = vld [vmem:[%s1086 + $0x10] sm:$0xf]
    %v1090 = vld [vmem:[%s1086 + $0x18] sm:$0xf]
    %v1091 = vld [vmem:[%s1086 + $0x20] sm:$0xf]
    %v1092 = vld [vmem:[%s1086 + $0x28] sm:$0xf]
    %v1093 = vld [vmem:[%s1086 + $0x30] sm:$0xf]
    %v1094 = vld [vmem:[%s1086 + $0x38] sm:$0xf]
    %v1095 = vld [vmem:[%s1086 + $0x48] sm:$0xf]
    %v1096 = vld [vmem:[%s1086 + $0x50] sm:$0xf]
    %v1097 = vld [vmem:[%s1086 + $0x58] sm:$0xf]
    %v1098 = vld [vmem:[%s1086 + $0x60] sm:$0xf]
    %v1099 = vld [vmem:[%s1086 + $0x68] sm:$0xf]
    %v1100 = vld [vmem:[%s1086 + $0x70] sm:$0xf]
    %v1101 = vld [vmem:[%s1086 + $0x78] sm:$0xf]
    %v1102 = vld [vmem:[%s1086 + $0x80] sm:$0xf]
    %1119 = vrot.lane.b32.xlu0 %v1087, 112
    %v1120 = vpop.permute.xlu0 %1119
    %1121 = vrot.lane.b32.xlu0 %v1088, 112
    %v1122 = vpop.permute.xlu0 %1121
    %1123 = vrot.lane.b32.xlu0 %v1089, 112
    %v1124 = vpop.permute.xlu0 %1123
    %1125 = vrot.lane.b32.xlu0 %v1090, 112
    %v1126 = vpop.permute.xlu0 %1125
    %1127 = vrot.lane.b32.xlu0 %v1091, 112
    %v1128 = vpop.permute.xlu0 %1127
    %1129 = vrot.lane.b32.xlu0 %v1092, 112
    %v1130 = vpop.permute.xlu0 %1129
    %1131 = vrot.lane.b32.xlu0 %v1093, 112
    %v1132 = vpop.permute.xlu0 %1131
    %1133 = vrot.lane.b32.xlu0 %v1094, 112
    %v1134 = vpop.permute.xlu0 %1133
    %1135 = vrot.lane.b32.xlu0 %v1095, 112
    %v1136 = vpop.permute.xlu0 %1135
    %1137 = vrot.lane.b32.xlu0 %v1096, 112
    %v1138 = vpop.permute.xlu0 %1137
    %1139 = vrot.lane.b32.xlu0 %v1097, 112
    %v1140 = vpop.permute.xlu0 %1139
    %1141 = vrot.lane.b32.xlu0 %v1098, 112
    %v1142 = vpop.permute.xlu0 %1141
    %1143 = vrot.lane.b32.xlu0 %v1099, 112
    %v1144 = vpop.permute.xlu0 %1143
    %1145 = vrot.lane.b32.xlu0 %v1100, 112
    %v1146 = vpop.permute.xlu0 %1145
    %1147 = vrot.lane.b32.xlu0 %v1101, 112
    %v1148 = vpop.permute.xlu0 %1147
    %1149 = vrot.lane.b32.xlu0 %v1102, 112
    %v1150 = vpop.permute.xlu0 %1149
    %vm1167 = vcmask 1044352
    %1168 = vst.msk [vmem:[#allocation2] sm:$0xf] %vm1167, %v1120
    %1169 = vst.msk [vmem:[#allocation2 + $0x8] sm:$0xf] %vm1167, %v1122
    %1170 = vst.msk [vmem:[#allocation2 + $0x10] sm:$0xf] %vm1167, %v1124
    %1171 = vst.msk [vmem:[#allocation2 + $0x18] sm:$0xf] %vm1167, %v1126
    %1172 = vst.msk [vmem:[#allocation2 + $0x20] sm:$0xf] %vm1167, %v1128
    %1173 = vst.msk [vmem:[#allocation2 + $0x28] sm:$0xf] %vm1167, %v1130
    %1174 = vst.msk [vmem:[#allocation2 + $0x30] sm:$0xf] %vm1167, %v1132
    %1175 = vst.msk [vmem:[#allocation2 + $0x38] sm:$0xf] %vm1167, %v1134
    %1176 = vst.msk [vmem:[#allocation2 + $0x40] sm:$0xf] %vm1167, %v1136
    %1177 = vst.msk [vmem:[#allocation2 + $0x48] sm:$0xf] %vm1167, %v1138
    %1178 = vst.msk [vmem:[#allocation2 + $0x50] sm:$0xf] %vm1167, %v1140
    %1179 = vst.msk [vmem:[#allocation2 + $0x58] sm:$0xf] %vm1167, %v1142
    %1180 = vst.msk [vmem:[#allocation2 + $0x60] sm:$0xf] %vm1167, %v1144
    %1181 = vst.msk [vmem:[#allocation2 + $0x68] sm:$0xf] %vm1167, %v1146
    %1182 = vst.msk [vmem:[#allocation2 + $0x70] sm:$0xf] %vm1167, %v1148
    %1183 = vst.msk [vmem:[#allocation2 + $0x78] sm:$0xf] %vm1167, %v1150
    %v1184 = vld [vmem:[%s988] sm:$0xf]
    %v1185 = vld [vmem:[%s988 + $0x4] sm:$0x1]
    %v1186 = vld [vmem:[%s988 + $0x8] sm:$0xf]
    %v1187 = vld [vmem:[%s988 + $0xc] sm:$0x1]
    %v1188 = vld [vmem:[%s988 + $0x10] sm:$0xf]
    %v1189 = vld [vmem:[%s988 + $0x14] sm:$0x1]
    %v1190 = vld [vmem:[%s988 + $0x18] sm:$0xf]
    %v1191 = vld [vmem:[%s988 + $0x1c] sm:$0x1]
    %v1192 = vld [vmem:[%s988 + $0x20] sm:$0xf]
    %v1193 = vld [vmem:[%s988 + $0x24] sm:$0x1]
    %v1194 = vld [vmem:[%s988 + $0x28] sm:$0xf]
    %v1195 = vld [vmem:[%s988 + $0x2c] sm:$0x1]
    %v1196 = vld [vmem:[%s988 + $0x30] sm:$0xf]
    %v1197 = vld [vmem:[%s988 + $0x34] sm:$0x1]
    %v1198 = vld [vmem:[%s988 + $0x38] sm:$0xf]
    %v1199 = vld [vmem:[%s988 + $0x3c] sm:$0x1]
    %v1200 = vld [vmem:[%s988 + $0x48] sm:$0xf]
    %v1201 = vld [vmem:[%s988 + $0x4c] sm:$0x1]
    %v1202 = vld [vmem:[%s988 + $0x50] sm:$0xf]
    %v1203 = vld [vmem:[%s988 + $0x54] sm:$0x1]
    %v1204 = vld [vmem:[%s988 + $0x58] sm:$0xf]
    %v1205 = vld [vmem:[%s988 + $0x5c] sm:$0x1]
    %v1206 = vld [vmem:[%s988 + $0x60] sm:$0xf]
    %v1207 = vld [vmem:[%s988 + $0x64] sm:$0x1]
    %v1208 = vld [vmem:[%s988 + $0x68] sm:$0xf]
    %v1209 = vld [vmem:[%s988 + $0x6c] sm:$0x1]
    %v1210 = vld [vmem:[%s988 + $0x70] sm:$0xf]
    %v1211 = vld [vmem:[%s988 + $0x74] sm:$0x1]
    %v1212 = vld [vmem:[%s988 + $0x78] sm:$0xf]
    %v1213 = vld [vmem:[%s988 + $0x7c] sm:$0x1]
    %v1214 = vld [vmem:[%s988 + $0x80] sm:$0xf]
    %v1215 = vld [vmem:[%s988 + $0x84] sm:$0x1]
    %v1217 = vshrl.u32 %v1184, 16
    %v1219 = vrot.slane %v1217, 4
    %v1220 = vshll.u32 %v1184, 16
    %v1222 = vrot.slane %v1220, 5
    %v1223 = vor.u32 %v1219, %v1222
    %v1224 = vrot.slane %v1223, 4
    %v1226 = vshll.u32 %v1185, 16
    %v1228 = vrot.slane %v1226, 5
    %v1229 = vsel %vm181, %v1224, %v1228
    %v1231 = vshrl.u32 %v1186, 16
    %v1233 = vrot.slane %v1231, 4
    %v1234 = vshll.u32 %v1186, 16
    %v1236 = vrot.slane %v1234, 5
    %v1237 = vor.u32 %v1233, %v1236
    %v1238 = vrot.slane %v1237, 4
    %v1240 = vshll.u32 %v1187, 16
    %v1242 = vrot.slane %v1240, 5
    %v1243 = vsel %vm181, %v1238, %v1242
    %v1245 = vshrl.u32 %v1188, 16
    %v1247 = vrot.slane %v1245, 4
    %v1248 = vshll.u32 %v1188, 16
    %v1250 = vrot.slane %v1248, 5
    %v1251 = vor.u32 %v1247, %v1250
    %v1252 = vrot.slane %v1251, 4
    %v1254 = vshll.u32 %v1189, 16
    %v1256 = vrot.slane %v1254, 5
    %v1257 = vsel %vm181, %v1252, %v1256
    %v1259 = vshrl.u32 %v1190, 16
    %v1261 = vrot.slane %v1259, 4
    %v1262 = vshll.u32 %v1190, 16
    %v1264 = vrot.slane %v1262, 5
    %v1265 = vor.u32 %v1261, %v1264
    %v1266 = vrot.slane %v1265, 4
    %v1268 = vshll.u32 %v1191, 16
    %v1270 = vrot.slane %v1268, 5
    %v1271 = vsel %vm181, %v1266, %v1270
    %v1273 = vshrl.u32 %v1192, 16
    %v1275 = vrot.slane %v1273, 4
    %v1276 = vshll.u32 %v1192, 16
    %v1278 = vrot.slane %v1276, 5
    %v1279 = vor.u32 %v1275, %v1278
    %v1280 = vrot.slane %v1279, 4
    %v1282 = vshll.u32 %v1193, 16
    %v1284 = vrot.slane %v1282, 5
    %v1285 = vsel %vm181, %v1280, %v1284
    %v1287 = vshrl.u32 %v1194, 16
    %v1289 = vrot.slane %v1287, 4
    %v1290 = vshll.u32 %v1194, 16
    %v1292 = vrot.slane %v1290, 5
    %v1293 = vor.u32 %v1289, %v1292
    %v1294 = vrot.slane %v1293, 4
    %v1296 = vshll.u32 %v1195, 16
    %v1298 = vrot.slane %v1296, 5
    %v1299 = vsel %vm181, %v1294, %v1298
    %v1301 = vshrl.u32 %v1196, 16
    %v1303 = vrot.slane %v1301, 4
    %v1304 = vshll.u32 %v1196, 16
    %v1306 = vrot.slane %v1304, 5
    %v1307 = vor.u32 %v1303, %v1306
    %v1308 = vrot.slane %v1307, 4
    %v1310 = vshll.u32 %v1197, 16
    %v1312 = vrot.slane %v1310, 5
    %v1313 = vsel %vm181, %v1308, %v1312
    %v1315 = vshrl.u32 %v1198, 16
    %v1317 = vrot.slane %v1315, 4
    %v1318 = vshll.u32 %v1198, 16
    %v1320 = vrot.slane %v1318, 5
    %v1321 = vor.u32 %v1317, %v1320
    %v1322 = vrot.slane %v1321, 4
    %v1324 = vshll.u32 %v1199, 16
    %v1326 = vrot.slane %v1324, 5
    %v1327 = vsel %vm181, %v1322, %v1326
    %v1329 = vshrl.u32 %v1200, 16
    %v1331 = vrot.slane %v1329, 4
    %v1332 = vshll.u32 %v1200, 16
    %v1334 = vrot.slane %v1332, 5
    %v1335 = vor.u32 %v1331, %v1334
    %v1336 = vrot.slane %v1335, 4
    %v1338 = vshll.u32 %v1201, 16
    %v1340 = vrot.slane %v1338, 5
    %v1341 = vsel %vm181, %v1336, %v1340
    %v1343 = vshrl.u32 %v1202, 16
    %v1345 = vrot.slane %v1343, 4
    %v1346 = vshll.u32 %v1202, 16
    %v1348 = vrot.slane %v1346, 5
    %v1349 = vor.u32 %v1345, %v1348
    %v1350 = vrot.slane %v1349, 4
    %v1352 = vshll.u32 %v1203, 16
    %v1354 = vrot.slane %v1352, 5
    %v1355 = vsel %vm181, %v1350, %v1354
    %v1357 = vshrl.u32 %v1204, 16
    %v1359 = vrot.slane %v1357, 4
    %v1360 = vshll.u32 %v1204, 16
    %v1362 = vrot.slane %v1360, 5
    %v1363 = vor.u32 %v1359, %v1362
    %v1364 = vrot.slane %v1363, 4
    %v1366 = vshll.u32 %v1205, 16
    %v1368 = vrot.slane %v1366, 5
    %v1369 = vsel %vm181, %v1364, %v1368
    %v1371 = vshrl.u32 %v1206, 16
    %v1373 = vrot.slane %v1371, 4
    %v1374 = vshll.u32 %v1206, 16
    %v1376 = vrot.slane %v1374, 5
    %v1377 = vor.u32 %v1373, %v1376
    %v1378 = vrot.slane %v1377, 4
    %v1380 = vshll.u32 %v1207, 16
    %v1382 = vrot.slane %v1380, 5
    %v1383 = vsel %vm181, %v1378, %v1382
    %v1385 = vshrl.u32 %v1208, 16
    %v1387 = vrot.slane %v1385, 4
    %v1388 = vshll.u32 %v1208, 16
    %v1390 = vrot.slane %v1388, 5
    %v1391 = vor.u32 %v1387, %v1390
    %v1392 = vrot.slane %v1391, 4
    %v1394 = vshll.u32 %v1209, 16
    %v1396 = vrot.slane %v1394, 5
    %v1397 = vsel %vm181, %v1392, %v1396
    %v1399 = vshrl.u32 %v1210, 16
    %v1401 = vrot.slane %v1399, 4
    %v1402 = vshll.u32 %v1210, 16
    %v1404 = vrot.slane %v1402, 5
    %v1405 = vor.u32 %v1401, %v1404
    %v1406 = vrot.slane %v1405, 4
    %v1408 = vshll.u32 %v1211, 16
    %v1410 = vrot.slane %v1408, 5
    %v1411 = vsel %vm181, %v1406, %v1410
    %v1413 = vshrl.u32 %v1212, 16
    %v1415 = vrot.slane %v1413, 4
    %v1416 = vshll.u32 %v1212, 16
    %v1418 = vrot.slane %v1416, 5
    %v1419 = vor.u32 %v1415, %v1418
    %v1420 = vrot.slane %v1419, 4
    %v1422 = vshll.u32 %v1213, 16
    %v1424 = vrot.slane %v1422, 5
    %v1425 = vsel %vm181, %v1420, %v1424
    %v1427 = vshrl.u32 %v1214, 16
    %v1429 = vrot.slane %v1427, 4
    %v1430 = vshll.u32 %v1214, 16
    %v1432 = vrot.slane %v1430, 5
    %v1433 = vor.u32 %v1429, %v1432
    %v1434 = vrot.slane %v1433, 4
    %v1436 = vshll.u32 %v1215, 16
    %v1438 = vrot.slane %v1436, 5
    %v1439 = vsel %vm181, %v1434, %v1438
    %1456 = vst.msk [vmem:[#allocation2 + $0x4] sm:$0xf] %vm32, %v1229
    %1457 = vst.msk [vmem:[#allocation2 + $0xc] sm:$0xf] %vm32, %v1243
    %1458 = vst.msk [vmem:[#allocation2 + $0x14] sm:$0xf] %vm32, %v1257
    %1459 = vst.msk [vmem:[#allocation2 + $0x1c] sm:$0xf] %vm32, %v1271
    %1460 = vst.msk [vmem:[#allocation2 + $0x24] sm:$0xf] %vm32, %v1285
    %1461 = vst.msk [vmem:[#allocation2 + $0x2c] sm:$0xf] %vm32, %v1299
    %1462 = vst.msk [vmem:[#allocation2 + $0x34] sm:$0xf] %vm32, %v1313
    %1463 = vst.msk [vmem:[#allocation2 + $0x3c] sm:$0xf] %vm32, %v1327
    %1464 = vst.msk [vmem:[#allocation2 + $0x44] sm:$0xf] %vm32, %v1341
    %1465 = vst.msk [vmem:[#allocation2 + $0x4c] sm:$0xf] %vm32, %v1355
    %1466 = vst.msk [vmem:[#allocation2 + $0x54] sm:$0xf] %vm32, %v1369
    %1467 = vst.msk [vmem:[#allocation2 + $0x5c] sm:$0xf] %vm32, %v1383
    %1468 = vst.msk [vmem:[#allocation2 + $0x64] sm:$0xf] %vm32, %v1397
    %1469 = vst.msk [vmem:[#allocation2 + $0x6c] sm:$0xf] %vm32, %v1411
    %1470 = vst.msk [vmem:[#allocation2 + $0x74] sm:$0xf] %vm32, %v1425
    %1471 = vst.msk [vmem:[#allocation2 + $0x7c] sm:$0xf] %vm32, %v1439
    %v1472 = vld [vmem:[#allocation2] sm:$0xff]
    %v1473 = vld [vmem:[#allocation2 + $0x8] sm:$0xff]
    %v1474 = vld [vmem:[#allocation2 + $0x10] sm:$0xff]
    %v1475 = vld [vmem:[#allocation2 + $0x18] sm:$0xff]
    %v1476 = vld [vmem:[#allocation2 + $0x20] sm:$0xff]
    %v1477 = vld [vmem:[#allocation2 + $0x28] sm:$0xff]
    %v1478 = vld [vmem:[#allocation2 + $0x30] sm:$0xff]
    %v1479 = vld [vmem:[#allocation2 + $0x38] sm:$0xff]
    %v1480 = vld [vmem:[#allocation2 + $0x40] sm:$0xff]
    %v1481 = vld [vmem:[#allocation2 + $0x48] sm:$0xff]
    %v1482 = vld [vmem:[#allocation2 + $0x50] sm:$0xff]
    %v1483 = vld [vmem:[#allocation2 + $0x58] sm:$0xff]
    %v1484 = vld [vmem:[#allocation2 + $0x60] sm:$0xff]
    %v1485 = vld [vmem:[#allocation2 + $0x68] sm:$0xff]
    %v1486 = vld [vmem:[#allocation2 + $0x70] sm:$0xff]
    %v1487 = vld [vmem:[#allocation2 + $0x78] sm:$0xff]
    %v1488 = vld [vmem:[%s1] sm:$0xf]
    %v1489 = vld [vmem:[%s1 + $0x4] sm:$0xf]
    %v1490 = vld [vmem:[%s1 + $0x8] sm:$0xf]
    %v1491 = vld [vmem:[%s1 + $0xc] sm:$0xf]
    %v1492 = vld [vmem:[%s1 + $0x10] sm:$0xf]
    %v1493 = vld [vmem:[%s1 + $0x14] sm:$0xf]
    %v1494 = vld [vmem:[%s1 + $0x18] sm:$0xf]
    %v1495 = vld [vmem:[%s1 + $0x1c] sm:$0xf]
    %v1496 = vld [vmem:[%s1 + $0x20] sm:$0xf]
    %v1497 = vld [vmem:[%s1 + $0x24] sm:$0xf]
    %v1498 = vld [vmem:[%s1 + $0x28] sm:$0xf]
    %v1499 = vld [vmem:[%s1 + $0x2c] sm:$0xf]
    %v1500 = vld [vmem:[%s1 + $0x30] sm:$0xf]
    %v1501 = vld [vmem:[%s1 + $0x34] sm:$0xf]
    %v1502 = vld [vmem:[%s1 + $0x38] sm:$0xf]
    %v1503 = vld [vmem:[%s1 + $0x3c] sm:$0xf]
    %v1504 = vld [vmem:[%s1 + $0x40] sm:$0xf]
    %v1505 = vld [vmem:[%s1 + $0x44] sm:$0xf]
    %v1506 = vld [vmem:[%s2] sm:$0x1]
    %v1508 = vperm.slane %v1506, 0
    %v1526 = vunpack.c.l.b16 %v1472
    %v1527 = vunpack.c.h.b16 %v1472
    %v1528 = vunpack.c.l.b16 %v1473
    %v1529 = vunpack.c.h.b16 %v1473
    %v1530 = vunpack.c.l.b16 %v1474
    %v1531 = vunpack.c.h.b16 %v1474
    %v1532 = vunpack.c.l.b16 %v1475
    %v1533 = vunpack.c.h.b16 %v1475
    %v1534 = vunpack.c.l.b16 %v1476
    %v1535 = vunpack.c.h.b16 %v1476
    %v1536 = vunpack.c.l.b16 %v1477
    %v1537 = vunpack.c.h.b16 %v1477
    %v1538 = vunpack.c.l.b16 %v1478
    %v1539 = vunpack.c.h.b16 %v1478
    %v1540 = vunpack.c.l.b16 %v1479
    %v1541 = vunpack.c.h.b16 %v1479
    %v1542 = vunpack.c.l.b16 %v1480
    %v1543 = vunpack.c.h.b16 %v1480
    %v1544 = vunpack.c.l.b16 %v1481
    %v1545 = vunpack.c.h.b16 %v1481
    %v1546 = vunpack.c.l.b16 %v1482
    %v1547 = vunpack.c.h.b16 %v1482
    %v1548 = vunpack.c.l.b16 %v1483
    %v1549 = vunpack.c.h.b16 %v1483
    %v1550 = vunpack.c.l.b16 %v1484
    %v1551 = vunpack.c.h.b16 %v1484
    %v1552 = vunpack.c.l.b16 %v1485
    %v1553 = vunpack.c.h.b16 %v1485
    %v1554 = vunpack.c.l.b16 %v1486
    %v1555 = vunpack.c.h.b16 %v1486
    %v1556 = vunpack.c.l.b16 %v1487
    %v1557 = vunpack.c.h.b16 %v1487
    %v1558 = vpack.c.b16 %v1528, %v1526
    %v1559 = vpack.c.b16 %v1529, %v1527
    %v1560 = vpack.c.b16 %v1532, %v1530
    %v1561 = vpack.c.b16 %v1533, %v1531
    %v1562 = vpack.c.b16 %v1536, %v1534
    %v1563 = vpack.c.b16 %v1537, %v1535
    %v1564 = vpack.c.b16 %v1540, %v1538
    %v1565 = vpack.c.b16 %v1541, %v1539
    %v1566 = vpack.c.b16 %v1544, %v1542
    %v1567 = vpack.c.b16 %v1545, %v1543
    %v1568 = vpack.c.b16 %v1548, %v1546
    %v1569 = vpack.c.b16 %v1549, %v1547
    %v1570 = vpack.c.b16 %v1552, %v1550
    %v1571 = vpack.c.b16 %v1553, %v1551
    %v1572 = vpack.c.b16 %v1556, %v1554
    %v1573 = vpack.c.b16 %v1557, %v1555
    %v1600 = vunpack.c.l.b16 %v1488
    %v1601 = vunpack.c.l.b16 %v1489
    %v1602 = vunpack.c.l.b16 %v1490
    %v1603 = vunpack.c.l.b16 %v1491
    %v1604 = vunpack.c.l.b16 %v1492
    %v1605 = vunpack.c.l.b16 %v1493
    %v1606 = vunpack.c.l.b16 %v1494
    %v1607 = vunpack.c.l.b16 %v1495
    %v1608 = vunpack.c.l.b16 %v1496
    %v1609 = vunpack.c.l.b16 %v1497
    %v1610 = vunpack.c.l.b16 %v1498
    %v1611 = vunpack.c.l.b16 %v1499
    %v1612 = vunpack.c.l.b16 %v1500
    %v1613 = vunpack.c.l.b16 %v1501
    %v1614 = vunpack.c.l.b16 %v1502
    %v1615 = vunpack.c.l.b16 %v1503
    %v1616 = vunpack.c.l.b16 %v1504
    %v1617 = vunpack.c.l.b16 %v1505
    %v1618 = vpack.c.b16 %v1601, %v1600
    %v1619 = vpack.c.b16 %v1603, %v1602
    %v1620 = vpack.c.b16 %v1605, %v1604
    %v1621 = vpack.c.b16 %v1607, %v1606
    %v1622 = vpack.c.b16 %v1609, %v1608
    %v1623 = vpack.c.b16 %v1611, %v1610
    %v1624 = vpack.c.b16 %v1613, %v1612
    %v1625 = vpack.c.b16 %v1615, %v1614
    %v1626 = vpack.c.b16 %v1617, %v1616
    %vm1636 = vcmask 130048
    %v1638 = vsel %vm1636, %v1559, 0
    %v1641 = vsel %vm1636, %v1561, 0
    %v1644 = vsel %vm1636, %v1563, 0
    %v1647 = vsel %vm1636, %v1565, 0
    %v1650 = vsel %vm1636, %v1567, 0
    %v1653 = vsel %vm1636, %v1569, 0
    %v1656 = vsel %vm1636, %v1571, 0
    %v1659 = vsel %vm1636, %v1573, 0
    %1661 = vmatpush.bf16.msra.mxu0 %v1625
    %1662 = vmatpush.bf16.msra.mxu0 %v1624
    %1663 = vmatpush.bf16.msra.mxu0 %v1623
    %1664 = vmatpush.bf16.msra.mxu0 %v1622
    %1665 = vmatpush.bf16.msra.mxu0 %v1621
    %1666 = vmatpush.bf16.msra.mxu0 %v1620
    %1667 = vmatpush.bf16.msra.mxu0 %v1619
    %1668 = vmatpush.bf16.msra.mxu0 %v1618
    %1669 = vmatmul.bf16.gmra.mxu0 %v1558
    %v1670 = vpop.f32.mrf.mxu0
    %v1671 = vadd.f32 %v1508, %v1670
    %v1672 = vpop.f32.mrf.mxu0
    %v1673 = vadd.f32 %v1508, %v1672
    %1674 = vmatmul.bf16.gmra.mxu0 %v1560
    %v1675 = vpop.f32.mrf.mxu0
    %v1676 = vadd.f32 %v1508, %v1675
    %v1677 = vpop.f32.mrf.mxu0
    %v1678 = vadd.f32 %v1508, %v1677
    %1679 = vmatmul.bf16.gmra.mxu0 %v1562
    %v1680 = vpop.f32.mrf.mxu0
    %v1681 = vadd.f32 %v1508, %v1680
    %v1682 = vpop.f32.mrf.mxu0
    %v1683 = vadd.f32 %v1508, %v1682
    %1684 = vmatmul.bf16.gmra.mxu0 %v1564
    %v1685 = vpop.f32.mrf.mxu0
    %v1686 = vadd.f32 %v1508, %v1685
    %v1687 = vpop.f32.mrf.mxu0
    %v1688 = vadd.f32 %v1508, %v1687
    %1689 = vmatmul.bf16.gmra.mxu0 %v1566
    %v1690 = vpop.f32.mrf.mxu0
    %v1691 = vadd.f32 %v1508, %v1690
    %v1692 = vpop.f32.mrf.mxu0
    %v1693 = vadd.f32 %v1508, %v1692
    %1694 = vmatmul.bf16.gmra.mxu0 %v1568
    %v1695 = vpop.f32.mrf.mxu0
    %v1696 = vadd.f32 %v1508, %v1695
    %v1697 = vpop.f32.mrf.mxu0
    %v1698 = vadd.f32 %v1508, %v1697
    %1699 = vmatmul.bf16.gmra.mxu0 %v1570
    %v1700 = vpop.f32.mrf.mxu0
    %v1701 = vadd.f32 %v1508, %v1700
    %v1702 = vpop.f32.mrf.mxu0
    %v1703 = vadd.f32 %v1508, %v1702
    %1704 = vmatmul.bf16.gmra.mxu0 %v1572
    %v1705 = vpop.f32.mrf.mxu0
    %v1706 = vadd.f32 %v1508, %v1705
    %v1707 = vpop.f32.mrf.mxu0
    %v1708 = vadd.f32 %v1508, %v1707
    %1709 = vdwg.mxu0
    %1710 = vmatpush.bf16.msra.mxu0 0
    %1711 = vmatpush.bf16.msra.mxu0 0
    %1712 = vmatpush.bf16.msra.mxu0 0
    %1713 = vmatpush.bf16.msra.mxu0 0
    %1714 = vmatpush.bf16.msra.mxu0 0
    %1715 = vmatpush.bf16.msra.mxu0 0
    %1716 = vmatpush.bf16.msra.mxu0 0
    %1717 = vmatpush.bf16.msra.mxu0 %v1626
    %1718 = vmatmul.bf16.gmra.mxu0 %v1638
    %v1719 = vpop.f32.mrf.mxu0
    %v1720 = vadd.f32 %v1671, %v1719
    %v1721 = vpop.f32.mrf.mxu0
    %v1722 = vadd.f32 %v1673, %v1721
    %1723 = vmatmul.bf16.gmra.mxu0 %v1641
    %v1724 = vpop.f32.mrf.mxu0
    %v1725 = vadd.f32 %v1676, %v1724
    %v1726 = vpop.f32.mrf.mxu0
    %v1727 = vadd.f32 %v1678, %v1726
    %1728 = vmatmul.bf16.gmra.mxu0 %v1644
    %v1729 = vpop.f32.mrf.mxu0
    %v1730 = vadd.f32 %v1681, %v1729
    %v1731 = vpop.f32.mrf.mxu0
    %v1732 = vadd.f32 %v1683, %v1731
    %1733 = vmatmul.bf16.gmra.mxu0 %v1647
    %v1734 = vpop.f32.mrf.mxu0
    %v1735 = vadd.f32 %v1686, %v1734
    %v1736 = vpop.f32.mrf.mxu0
    %v1737 = vadd.f32 %v1688, %v1736
    %1738 = vmatmul.bf16.gmra.mxu0 %v1650
    %v1739 = vpop.f32.mrf.mxu0
    %v1740 = vadd.f32 %v1691, %v1739
    %v1741 = vpop.f32.mrf.mxu0
    %v1742 = vadd.f32 %v1693, %v1741
    %1743 = vmatmul.bf16.gmra.mxu0 %v1653
    %v1744 = vpop.f32.mrf.mxu0
    %v1745 = vadd.f32 %v1696, %v1744
    %v1746 = vpop.f32.mrf.mxu0
    %v1747 = vadd.f32 %v1698, %v1746
    %1748 = vmatmul.bf16.gmra.mxu0 %v1656
    %v1749 = vpop.f32.mrf.mxu0
    %v1750 = vadd.f32 %v1701, %v1749
    %v1751 = vpop.f32.mrf.mxu0
    %v1752 = vadd.f32 %v1703, %v1751
    %1753 = vmatmul.bf16.gmra.mxu0 %v1659
    %v1754 = vpop.f32.mrf.mxu0
    %v1755 = vadd.f32 %v1706, %v1754
    %v1756 = vpop.f32.mrf.mxu0
    %v1757 = vadd.f32 %v1708, %v1756
    %1758 = vdwg.mxu0
    %1759 = vst [vmem:[#allocation3] sm:$0xff] %v1720
    %1760 = vst [vmem:[#allocation3 + $0x8] sm:$0xff] %v1722
    %1761 = vst [vmem:[#allocation3 + $0x10] sm:$0xff] %v1725
    %1762 = vst [vmem:[#allocation3 + $0x18] sm:$0xff] %v1727
    %1763 = vst [vmem:[#allocation3 + $0x20] sm:$0xff] %v1730
    %1764 = vst [vmem:[#allocation3 + $0x28] sm:$0xff] %v1732
    %1765 = vst [vmem:[#allocation3 + $0x30] sm:$0xff] %v1735
    %1766 = vst [vmem:[#allocation3 + $0x38] sm:$0xff] %v1737
    %1767 = vst [vmem:[#allocation3 + $0x40] sm:$0xff] %v1740
    %1768 = vst [vmem:[#allocation3 + $0x48] sm:$0xff] %v1742
    %1769 = vst [vmem:[#allocation3 + $0x50] sm:$0xff] %v1745
    %1770 = vst [vmem:[#allocation3 + $0x58] sm:$0xff] %v1747
    %1771 = vst [vmem:[#allocation3 + $0x60] sm:$0xff] %v1750
    %1772 = vst [vmem:[#allocation3 + $0x68] sm:$0xff] %v1752
    %1773 = vst [vmem:[#allocation3 + $0x70] sm:$0xff] %v1755
    %1774 = vst [vmem:[#allocation3 + $0x78] sm:$0xff] %v1757
    // Predicated region
    $region14: #{tpu_custom_call.1} parent=1 // pred_check
      _
    $region15: #{tpu_custom_call.1} parent=1 // pred_check_branch
      %1776 = sbr.rel (0) target = $region17
    $region16: #{tpu_custom_call.1} parent=1 // pred_region
      %1778 = vsyncadd [#allocation4], 0
      %s1779 = sshll.u32 [#allocation3], 4
      %s1780 = int_to_ptr.vmem [resolvable:$true] %s1779
      %s1781 = sshll.u32 %s3, 4
      %s1782 = int_to_ptr.hbm [resolvable:$true] %s1781
      %1787 = dma.vmem_to_hbm [thread:$0]  %s1780, 2048, %s1782, [#allocation4], 128, 128, 8
    $region17: #{tpu_custom_call.1} parent=1 // pred_fallthru
      _
    // Predicated region
    $region18: #{tpu_custom_call.1} parent=1 // pred_check
      _
    $region19: #{tpu_custom_call.1} parent=1 // pred_check_branch
      %1789 = sbr.rel (0) target = $region21
    $region20: #{tpu_custom_call.1} parent=1 // pred_region
      %1791 = dma.done [#allocation4], 2048
    $region21: #{tpu_custom_call.1} parent=1 // pred_fallthru
      _
    %1792 = vsyncpa [#allocation4], 1

</llo_original>
